<compile_context>
chip_gen: v5e
topology: v5e:2x2
jax: 0.10.0
libtpu: 0.0.40
codegen_flags: <defaults>
</compile_context>

<pallas_src>
import functools

import jax
import jax.numpy as jnp
from jax.experimental import pallas as pl
from jax.experimental.pallas import tpu as pltpu

LANE = 128


def _round_up(x, m):
    return (x + m - 1) // m * m


def _const_spec(shape):
    """Full-array block whose block index never changes across the grid.

    Single-buffer it (pl.Buffered(1)) when the running JAX supports it so the
    resident weights/masks don't pay for a useless second pipeline buffer.
    """
    index_map = lambda nb: (0,) * len(shape)
    try:
        return pl.BlockSpec(shape, index_map, pipeline_mode=pl.Buffered(1))
    except Exception:  # older JAX without pipeline_mode / Buffered
        return pl.BlockSpec(shape, index_map)


# ----------------------------------------------------------------------------
# Fused kernel: all conv layers + ReLU + time-mean + FC, one batch tile / step
# ----------------------------------------------------------------------------
def _make_fused_tcn_kernel(num_layers, kernel_size, seq_len, batch_tile,
                           seg_len, off):
    pad = kernel_size - 1
    m_rows = batch_tile * seg_len          # matmul M (multiple of 8)

    def kernel(x_ref, t_ref, sel_ref, *args):
        # x_ref  : (off + m_rows, Cp0) bf16  -- segment layout, halos zeroed
        # t_ref  : (m_rows, 1)       f32    -- time index within each segment
        # sel_ref: (batch_tile, m_rows) f32 -- per-segment mean selection (1/l)
        # args   : w_0, b_0, ..., w_{n-1}, b_{n-1}, fc_w, fc_b, out_ref, act_ref
        fc_w_ref = args[2 * num_layers]
        fc_b_ref = args[2 * num_layers + 1]
        out_ref = args[2 * num_layers + 2]
        act_ref = args[2 * num_layers + 3]

        if num_layers > 1:
            t = t_ref[...]                                  # (m_rows, 1) f32
            # Zero the aligned halo block ahead of element 0 once per step; the
            # rest of the zero-halo invariant is kept by the per-layer mask.
            act_ref[0:off, :] = jnp.zeros((off, act_ref.shape[1]),
                                          act_ref.dtype)

        l_in = seq_len
        y = None
        for i in range(num_layers):
            w_ref = args[2 * i]                             # (K, Cp_in, Cp_out) bf16
            b_ref = args[2 * i + 1]                         # (1, Cp_out) f32
            cp_in = w_ref.shape[1]
            cp_out = w_ref.shape[2]
            l_out = l_in + pad

            # Conv as K shifted big-M matmuls over the whole batch tile,
            # accumulated in f32 on the MXU (no im2col concatenate copies).
            acc = None
            for j in range(kernel_size):
                start = off - pad + j
                if i == 0:
                    tap = x_ref[start:start + m_rows, 0:cp_in]
                else:
                    tap = act_ref[start:start + m_rows, 0:cp_in]
                d = jnp.dot(tap, w_ref[j], preferred_element_type=jnp.float32)
                acc = d if acc is None else acc + d

            # Bias + ReLU in f32 (v5e has no bf16 VALU); store bf16 once.
            y = jnp.maximum(acc + b_ref[...], 0.0)
            # TODO(synk): nn.Dropout is identity at inference; training-mode
            #             random masking is not reproduced here.

            if i + 1 < num_layers:
                # Zero rows outside each element's valid [0, l_out) range so
                # they form the next layer's exact zero halo, then store once
                # into the persistent VMEM scratch ((8,128)-aligned store:
                # `off` and `m_rows` are multiples of 8).
                y = jnp.where(t < jnp.float32(l_out), y, 0.0)
                act_ref[off:off + m_rows, 0:cp_out] = y.astype(act_ref.dtype)
                l_in = l_out

        # Fused epilogue: per-element time-mean via one small f32 matmul with
        # the precomputed selection matrix (invalid tail rows excluded and
        # 1/l_out folded in), then the FC matmul + bias.
        mean = jnp.dot(sel_ref[...], y, preferred_element_type=jnp.float32)
        out = jnp.dot(mean.astype(jnp.bfloat16), fc_w_ref[...],
                      preferred_element_type=jnp.float32) + fc_b_ref[...]
        out_ref[...] = out.astype(out_ref.dtype)            # lane-dense (B, Ep)

    return kernel


# ----------------------------------------------------------------------------
# Parameters: PyTorch layout -> padded per-tap bf16 matmul operands
# ----------------------------------------------------------------------------
def init_tcn_params(key, input_size, num_channels, kernel_size, embedding_dim):
    """Random parameters in PyTorch layout: Conv1d (out, in, k); Linear (E, C)."""
    params = {"convs": [], "fc": None}
    for i, out_ch in enumerate(num_channels):
        in_ch = input_size if i == 0 else num_channels[i - 1]
        key, k1, k2 = jax.random.split(key, 3)
        w = 0.1 * jax.random.normal(k1, (out_ch, in_ch, kernel_size), jnp.float32)
        b = 0.1 * jax.random.normal(k2, (out_ch,), jnp.float32)
        params["convs"].append((w, b))
    key, k1, k2 = jax.random.split(key, 3)
    w_fc = 0.1 * jax.random.normal(k1, (embedding_dim, num_channels[-1]), jnp.float32)
    b_fc = 0.1 * jax.random.normal(k2, (embedding_dim,), jnp.float32)
    params["fc"] = (w_fc, b_fc)
    return params


def prepare_params(params, kernel_size):
    """Pad channel dims to lane multiples, build per-tap (K, Cp_in, Cp_out)
    bf16 weight stacks (the kernel runs each conv as K shifted matmuls, so
    there is no K*Cp zero-padded im2col contraction), biases stay f32."""
    prepared = {"convs": [], "fc": None}
    for w, b in params["convs"]:
        out_ch, in_ch, k = w.shape
        cp_in = _round_up(in_ch, LANE)
        cp_out = _round_up(out_ch, LANE)
        w_taps = jnp.transpose(w, (2, 1, 0))                       # (k, in, out)
        w_taps = jnp.pad(w_taps, ((0, 0), (0, cp_in - in_ch), (0, cp_out - out_ch)))
        b_p = jnp.pad(b, (0, cp_out - out_ch)).reshape(1, cp_out).astype(jnp.float32)
        prepared["convs"].append((w_taps.astype(jnp.bfloat16), b_p))
    w_fc, b_fc = params["fc"]
    emb, c_last = w_fc.shape
    cp_last = _round_up(c_last, LANE)
    ep = _round_up(emb, LANE)
    w_fc_p = jnp.pad(jnp.transpose(w_fc), ((0, cp_last - c_last), (0, ep - emb)))
    b_fc_p = jnp.pad(b_fc, (0, ep - emb)).reshape(1, ep).astype(jnp.float32)
    prepared["fc"] = (w_fc_p.astype(jnp.bfloat16), b_fc_p)
    return prepared


# ----------------------------------------------------------------------------
# Module-equivalent forward
# ----------------------------------------------------------------------------
@functools.partial(jax.jit, static_argnames=("kernel_size", "embedding_dim"))
def tcn_encoder_forward(x_ncl, params, kernel_size=3, embedding_dim=64):
    """x_ncl: (N, C_in, L) exactly like the PyTorch module. Returns (N, embedding_dim)."""
    n, c_in, seq_len = x_ncl.shape
    pad = kernel_size - 1
    num_layers = len(params["convs"])

    cp0 = _round_up(c_in, LANE)
    cp_outs = [w.shape[2] for (w, _b) in params["convs"]]
    fc_w, fc_b = params["fc"]
    cp_last, ep = fc_w.shape
    c_store = max(cp_outs[:-1]) if num_layers > 1 else LANE   # scratch lane width
    c_big = max([cp0] + cp_outs)

    # Segment layout: each batch element gets `seg` rows (enough for the last
    # conv layer's output); an `off`-row zero block (8-aligned) sits in front
    # of element 0 and supplies its leading halo, later elements' halos come
    # from the (masked-to-zero) tail of the previous segment.
    seg = seq_len + (num_layers + 1) * pad
    off = max(8, _round_up(pad, 8))
    l_out_last = seq_len + num_layers * pad

    weight_bytes = 0
    for w_t, b_p in params["convs"] + [params["fc"]]:
        weight_bytes += int(w_t.size) * w_t.dtype.itemsize
        weight_bytes += int(b_p.size) * b_p.dtype.itemsize

    try:
        vmem_cap = int(pltpu.get_tpu_info().vmem_capacity_bytes)
    except Exception:
        vmem_cap = 64 << 20            # v7x has the smallest per-core VMEM
    vmem_budget = int(vmem_cap * 0.70)

    # Batch tile: multiple of 8 (full sublanes, unmasked stores), >= 2 grid
    # steps when the batch allows (so both v7x TensorCores get work under
    # "parallel"), shrunk while the per-step working set exceeds the budget.
    n_pad8 = _round_up(n, 8)
    if n_pad8 <= 8:
        batch_tile = n_pad8
    else:
        batch_tile = min(32, _round_up((n_pad8 + 1) // 2, 8))

    def tile_bytes(bt):
        rows = bt * seg
        t_rows = off + rows
        return (2 * t_rows * cp0 * 2          # x block (bf16, double-buffered)
                + t_rows * c_store * 2        # activation scratch (bf16)
                + 5 * rows * c_big * 4        # live f32 intermediates
                + 2 * bt * ep * 4             # out block (double-buffered)
                + rows * 4 + bt * rows * 4)   # t_seg + sel

    while batch_tile > 8 and weight_bytes + tile_bytes(batch_tile) > vmem_budget:
        batch_tile -= 8

    n_pad = _round_up(n, batch_tile)
    n_tiles = n_pad // batch_tile
    m_rows = batch_tile * seg
    tile_rows = off + m_rows

    # ---- input: NCL -> lane-padded bf16 segment layout -------------------
    x = jnp.transpose(x_ncl, (0, 2, 1)).astype(jnp.bfloat16)        # (N, L, C)
    x = jnp.pad(x, ((0, n_pad - n), (0, seg - seq_len), (0, cp0 - c_in)))
    x = x.reshape(n_tiles, m_rows, cp0)
    x = jnp.pad(x, ((0, 0), (off, 0), (0, 0)))                      # halo block
    x2d = x.reshape(n_tiles * tile_rows, cp0)

    # Grid-invariant helpers: time-within-segment (for the per-layer valid-row
    # mask) and the per-segment mean selection matrix (1/l_out folded in,
    # invalid tail rows excluded).
    t_seg = jnp.tile(jnp.arange(seg, dtype=jnp.float32), batch_tile)
    t_seg = t_seg.reshape(m_rows, 1)
    q = jnp.arange(m_rows, dtype=jnp.int32)
    valid = (q % seg) < l_out_last
    sel = (q[None, :] // seg) == jnp.arange(batch_tile, dtype=jnp.int32)[:, None]
    sel = (sel & valid[None, :]).astype(jnp.float32) * (1.0 / float(l_out_last))

    # ---- operands + BlockSpecs -------------------------------------------
    operands = [x2d, t_seg, sel]
    in_specs = [pl.BlockSpec((tile_rows, cp0), lambda nb: (nb, 0)),
                _const_spec(t_seg.shape), _const_spec(sel.shape)]
    for w_t, b_p in params["convs"]:
        operands += [w_t, b_p]
        in_specs += [_const_spec(w_t.shape), _const_spec(b_p.shape)]
    operands += [fc_w, fc_b]
    in_specs += [_const_spec(fc_w.shape), _const_spec(fc_b.shape)]

    # Advisory cost estimate.
    flops = 0
    for (w_t, _b) in params["convs"]:
        k_, ci, co = w_t.shape
        flops += 2 * n_tiles * k_ * m_rows * ci * co
    flops += 2 * n_tiles * batch_tile * m_rows * cp_last + 2 * n_pad * cp_last * ep
    bytes_accessed = (int(x2d.size) * 2 + n_pad * ep * 4 + weight_bytes
                      + int(t_seg.size) * 4 + int(sel.size) * 4)
    cost = pl.CostEstimate(flops=int(flops), transcendentals=0,
                           bytes_accessed=int(bytes_accessed))

    vmem_limit = int(min(max(weight_bytes + tile_bytes(batch_tile) + (8 << 20),
                             16 << 20), vmem_budget))

    kernel = _make_fused_tcn_kernel(num_layers, kernel_size, seq_len,
                                    batch_tile, seg, off)
    out_padded = pl.pallas_call(
        kernel,
        out_shape=jax.ShapeDtypeStruct((n_pad, ep), jnp.float32),
        grid_spec=pltpu.PrefetchScalarGridSpec(
            num_scalar_prefetch=0,
            grid=(n_tiles,),
            in_specs=in_specs,
            out_specs=pl.BlockSpec((batch_tile, ep), lambda nb: (nb, 0)),
            scratch_shapes=[pltpu.VMEM((tile_rows, c_store), jnp.bfloat16)],
        ),
        compiler_params=pltpu.CompilerParams(
            dimension_semantics=("parallel",),
            vmem_limit_bytes=vmem_limit),
        cost_estimate=cost,
    )(*operands)

    return out_padded[:n, :embedding_dim]


if __name__ == "__main__":
    # Small shapes consistent with the module: Conv1d input is (N, C_in, L).
    N, C_in, L = 2, 4, 16
    num_channels = (8, 16)
    kernel_size = 3
    embedding_dim = 32

    key = jax.random.PRNGKey(0)
    key, kx = jax.random.split(key)
    x = jax.random.normal(kx, (N, C_in, L), jnp.float32)

    raw_params = init_tcn_params(key, C_in, num_channels, kernel_size, embedding_dim)
    params = prepare_params(raw_params, kernel_size)

    out = tcn_encoder_forward(x, params, kernel_size=kernel_size,
                              embedding_dim=embedding_dim)
    out = jax.block_until_ready(out)
    assert out.shape == (N, embedding_dim), out.shape

    # Pure-JAX reference (loose tolerance: kernel matmuls run in bf16).
    def reference(x_ncl, raw):
        y = x_ncl
        for w, b in raw["convs"]:
            y = jax.lax.conv_general_dilated(
                y, w, window_strides=(1,),
                padding=[(kernel_size - 1, kernel_size - 1)],
                dimension_numbers=("NCH", "OIH", "NCH"))
            y = jnp.maximum(y + b[None, :, None], 0.0)
        y = jnp.mean(y, axis=2)
        w_fc, b_fc = raw["fc"]
        return y @ w_fc.T + b_fc

    ref = reference(x, raw_params)
    assert jnp.allclose(out, ref, atol=5e-2, rtol=5e-2), \
        float(jnp.max(jnp.abs(out - ref)))
    print("KERNEL_OK")
</pallas_src>

<mosaic_0001>
module attributes {stable_mosaic.version = 11 : i64} {
  func.func @kernel(%arg0: i32, %arg1: memref<184x128xbf16, #tpu.memory_space<vmem>>, %arg2: memref<176x1xf32, #tpu.memory_space<vmem>>, %arg3: memref<8x176xf32, #tpu.memory_space<vmem>>, %arg4: memref<3x128x128xbf16, #tpu.memory_space<vmem>>, %arg5: memref<1x128xf32, #tpu.memory_space<vmem>>, %arg6: memref<3x128x128xbf16, #tpu.memory_space<vmem>>, %arg7: memref<1x128xf32, #tpu.memory_space<vmem>>, %arg8: memref<128x128xbf16, #tpu.memory_space<vmem>>, %arg9: memref<1x128xf32, #tpu.memory_space<vmem>>, %arg10: memref<8x128xf32, #tpu.memory_space<vmem>>, %arg11: memref<184x128xbf16, #tpu.memory_space<vmem>>) attributes {dimension_semantics = [#tpu.dimension_semantics<parallel>], iteration_bounds = array<i64: 1>, scalar_prefetch = 0 : i64, scratch_operands = 1 : i64, tpu.core_type = #tpu.core_type<tc>, window_params = [{transform_indices = @transform_0, window_bounds = array<i64: 184, 128>}, {pipeline_mode = #tpu.pipeline_mode<synchronous>, transform_indices = @transform_1, window_bounds = array<i64: 176, 1>}, {pipeline_mode = #tpu.pipeline_mode<synchronous>, transform_indices = @transform_2, window_bounds = array<i64: 8, 176>}, {pipeline_mode = #tpu.pipeline_mode<synchronous>, transform_indices = @transform_3, window_bounds = array<i64: 3, 128, 128>}, {pipeline_mode = #tpu.pipeline_mode<synchronous>, transform_indices = @transform_4, window_bounds = array<i64: 1, 128>}, {pipeline_mode = #tpu.pipeline_mode<synchronous>, transform_indices = @transform_5, window_bounds = array<i64: 3, 128, 128>}, {pipeline_mode = #tpu.pipeline_mode<synchronous>, transform_indices = @transform_6, window_bounds = array<i64: 1, 128>}, {pipeline_mode = #tpu.pipeline_mode<synchronous>, transform_indices = @transform_7, window_bounds = array<i64: 128, 128>}, {pipeline_mode = #tpu.pipeline_mode<synchronous>, transform_indices = @transform_8, window_bounds = array<i64: 1, 128>}, {transform_indices = @transform_9, window_bounds = array<i64: 8, 128>}]} {
    %c0 = arith.constant 0 : index
    %c0_0 = arith.constant 0 : index
    %0 = vector.load %arg2[%c0, %c0_0] : memref<176x1xf32, #tpu.memory_space<vmem>>, vector<176x1xf32>
    %cst = arith.constant 0.000000e+00 : bf16
    %1 = vector.broadcast %cst : bf16 to vector<8x128xbf16>
    %c0_1 = arith.constant 0 : index
    %c0_2 = arith.constant 0 : index
    %2 = vector.load %arg11[%c0_1, %c0_2] : memref<184x128xbf16, #tpu.memory_space<vmem>>, vector<8x128xbf16>
    tpu.vector_store %arg11[%c0_1, %c0_2], %1 {strides = array<i32>} : memref<184x128xbf16, #tpu.memory_space<vmem>>, vector<8x128xbf16>,
    %c6 = arith.constant 6 : index
    %c0_3 = arith.constant 0 : index
    %3 = vector.load %arg1[%c6, %c0_3] : memref<184x128xbf16, #tpu.memory_space<vmem>>, vector<176x128xbf16>
    %c0_4 = arith.constant 0 : index
    %c0_5 = arith.constant 0 : index
    %c0_6 = arith.constant 0 : index
    %4 = vector.load %arg4[%c0_4, %c0_5, %c0_6] : memref<3x128x128xbf16, #tpu.memory_space<vmem>>, vector<1x128x128xbf16>
    %5 = vector.shape_cast %4 : vector<1x128x128xbf16> to vector<128x128xbf16>
    %cst_7 = arith.constant dense<0.000000e+00> : vector<176x128xf32>
    %6 = tpu.matmul %3, %5, %cst_7 {dimension_numbers = #tpu.dot_dimension_numbers<[1], [0], [0], [1], [0, 0, 1, 1], [], []>} : vector<176x128xbf16>, vector<128x128xbf16>, vector<176x128xf32> -> vector<176x128xf32>
    %c7 = arith.constant 7 : index
    %c0_8 = arith.constant 0 : index
    %7 = vector.load %arg1[%c7, %c0_8] : memref<184x128xbf16, #tpu.memory_space<vmem>>, vector<176x128xbf16>
    %c1 = arith.constant 1 : index
    %c0_9 = arith.constant 0 : index
    %c0_10 = arith.constant 0 : index
    %8 = vector.load %arg4[%c1, %c0_9, %c0_10] : memref<3x128x128xbf16, #tpu.memory_space<vmem>>, vector<1x128x128xbf16>
    %9 = vector.shape_cast %8 : vector<1x128x128xbf16> to vector<128x128xbf16>
    %cst_11 = arith.constant dense<0.000000e+00> : vector<176x128xf32>
    %10 = tpu.matmul %7, %9, %cst_11 {dimension_numbers = #tpu.dot_dimension_numbers<[1], [0], [0], [1], [0, 0, 1, 1], [], []>} : vector<176x128xbf16>, vector<128x128xbf16>, vector<176x128xf32> -> vector<176x128xf32>
    %11 = arith.addf %6, %10 : vector<176x128xf32>
    %c8 = arith.constant 8 : index
    %c0_12 = arith.constant 0 : index
    %12 = vector.load %arg1[%c8, %c0_12] : memref<184x128xbf16, #tpu.memory_space<vmem>>, vector<176x128xbf16>
    %c2 = arith.constant 2 : index
    %c0_13 = arith.constant 0 : index
    %c0_14 = arith.constant 0 : index
    %13 = vector.load %arg4[%c2, %c0_13, %c0_14] : memref<3x128x128xbf16, #tpu.memory_space<vmem>>, vector<1x128x128xbf16>
    %14 = vector.shape_cast %13 : vector<1x128x128xbf16> to vector<128x128xbf16>
    %cst_15 = arith.constant dense<0.000000e+00> : vector<176x128xf32>
    %15 = tpu.matmul %12, %14, %cst_15 {dimension_numbers = #tpu.dot_dimension_numbers<[1], [0], [0], [1], [0, 0, 1, 1], [], []>} : vector<176x128xbf16>, vector<128x128xbf16>, vector<176x128xf32> -> vector<176x128xf32>
    %16 = arith.addf %11, %15 : vector<176x128xf32>
    %c0_16 = arith.constant 0 : index
    %c0_17 = arith.constant 0 : index
    %17 = vector.load %arg5[%c0_16, %c0_17] : memref<1x128xf32, #tpu.memory_space<vmem>>, vector<1x128xf32>
    %18 = vector.broadcast %17 : vector<1x128xf32> to vector<176x128xf32>
    %19 = arith.addf %16, %18 : vector<176x128xf32>
    %cst_18 = arith.constant 0.000000e+00 : f32
    %20 = vector.broadcast %cst_18 : f32 to vector<176x128xf32>
    %21 = arith.maximumf %19, %20 : vector<176x128xf32>
    %cst_19 = arith.constant 1.800000e+01 : f32
    %22 = vector.broadcast %cst_19 : f32 to vector<176x1xf32>
    %23 = arith.cmpf olt, %0, %22 : vector<176x1xf32>
    %cst_20 = arith.constant 0.000000e+00 : f32
    %24 = vector.shape_cast %23 : vector<176x1xi1> to vector<176x1xi1>
    %25 = vector.broadcast %24 : vector<176x1xi1> to vector<176x128xi1>
    %26 = vector.broadcast %cst_20 : f32 to vector<176x128xf32>
    %27 = arith.select %25, %21, %26 : vector<176x128xi1>, vector<176x128xf32>
    %28 = arith.truncf %27 : vector<176x128xf32> to vector<176x128xbf16>
    %c8_21 = arith.constant 8 : index
    %c0_22 = arith.constant 0 : index
    %29 = vector.load %arg11[%c8_21, %c0_22] : memref<184x128xbf16, #tpu.memory_space<vmem>>, vector<176x128xbf16>
    tpu.vector_store %arg11[%c8_21, %c0_22], %28 {strides = array<i32>} : memref<184x128xbf16, #tpu.memory_space<vmem>>, vector<176x128xbf16>,
    %c6_23 = arith.constant 6 : index
    %c0_24 = arith.constant 0 : index
    %30 = vector.load %arg11[%c6_23, %c0_24] : memref<184x128xbf16, #tpu.memory_space<vmem>>, vector<176x128xbf16>
    %c0_25 = arith.constant 0 : index
    %c0_26 = arith.constant 0 : index
    %c0_27 = arith.constant 0 : index
    %31 = vector.load %arg6[%c0_25, %c0_26, %c0_27] : memref<3x128x128xbf16, #tpu.memory_space<vmem>>, vector<1x128x128xbf16>
    %32 = vector.shape_cast %31 : vector<1x128x128xbf16> to vector<128x128xbf16>
    %cst_28 = arith.constant dense<0.000000e+00> : vector<176x128xf32>
    %33 = tpu.matmul %30, %32, %cst_28 {dimension_numbers = #tpu.dot_dimension_numbers<[1], [0], [0], [1], [0, 0, 1, 1], [], []>} : vector<176x128xbf16>, vector<128x128xbf16>, vector<176x128xf32> -> vector<176x128xf32>
    %c7_29 = arith.constant 7 : index
    %c0_30 = arith.constant 0 : index
    %34 = vector.load %arg11[%c7_29, %c0_30] : memref<184x128xbf16, #tpu.memory_space<vmem>>, vector<176x128xbf16>
    %c1_31 = arith.constant 1 : index
    %c0_32 = arith.constant 0 : index
    %c0_33 = arith.constant 0 : index
    %35 = vector.load %arg6[%c1_31, %c0_32, %c0_33] : memref<3x128x128xbf16, #tpu.memory_space<vmem>>, vector<1x128x128xbf16>
    %36 = vector.shape_cast %35 : vector<1x128x128xbf16> to vector<128x128xbf16>
    %cst_34 = arith.constant dense<0.000000e+00> : vector<176x128xf32>
    %37 = tpu.matmul %34, %36, %cst_34 {dimension_numbers = #tpu.dot_dimension_numbers<[1], [0], [0], [1], [0, 0, 1, 1], [], []>} : vector<176x128xbf16>, vector<128x128xbf16>, vector<176x128xf32> -> vector<176x128xf32>
    %38 = arith.addf %33, %37 : vector<176x128xf32>
    %c8_35 = arith.constant 8 : index
    %c0_36 = arith.constant 0 : index
    %39 = vector.load %arg11[%c8_35, %c0_36] : memref<184x128xbf16, #tpu.memory_space<vmem>>, vector<176x128xbf16>
    %c2_37 = arith.constant 2 : index
    %c0_38 = arith.constant 0 : index
    %c0_39 = arith.constant 0 : index
    %40 = vector.load %arg6[%c2_37, %c0_38, %c0_39] : memref<3x128x128xbf16, #tpu.memory_space<vmem>>, vector<1x128x128xbf16>
    %41 = vector.shape_cast %40 : vector<1x128x128xbf16> to vector<128x128xbf16>
    %cst_40 = arith.constant dense<0.000000e+00> : vector<176x128xf32>
    %42 = tpu.matmul %39, %41, %cst_40 {dimension_numbers = #tpu.dot_dimension_numbers<[1], [0], [0], [1], [0, 0, 1, 1], [], []>} : vector<176x128xbf16>, vector<128x128xbf16>, vector<176x128xf32> -> vector<176x128xf32>
    %43 = arith.addf %38, %42 : vector<176x128xf32>
    %c0_41 = arith.constant 0 : index
    %c0_42 = arith.constant 0 : index
    %44 = vector.load %arg7[%c0_41, %c0_42] : memref<1x128xf32, #tpu.memory_space<vmem>>, vector<1x128xf32>
    %45 = vector.broadcast %44 : vector<1x128xf32> to vector<176x128xf32>
    %46 = arith.addf %43, %45 : vector<176x128xf32>
    %cst_43 = arith.constant 0.000000e+00 : f32
    %47 = vector.broadcast %cst_43 : f32 to vector<176x128xf32>
    %48 = arith.maximumf %46, %47 : vector<176x128xf32>
    %c0_44 = arith.constant 0 : index
    %c0_45 = arith.constant 0 : index
    %49 = vector.load %arg3[%c0_44, %c0_45] : memref<8x176xf32, #tpu.memory_space<vmem>>, vector<8x176xf32>
    %cst_46 = arith.constant dense<0.000000e+00> : vector<8x128xf32>
    %50 = tpu.matmul %49, %48, %cst_46 {dimension_numbers = #tpu.dot_dimension_numbers<[1], [0], [0], [1], [0, 0, 1, 1], [], []>} : vector<8x176xf32>, vector<176x128xf32>, vector<8x128xf32> -> vector<8x128xf32>
    %51 = arith.truncf %50 : vector<8x128xf32> to vector<8x128xbf16>
    %c0_47 = arith.constant 0 : index
    %c0_48 = arith.constant 0 : index
    %52 = vector.load %arg8[%c0_47, %c0_48] : memref<128x128xbf16, #tpu.memory_space<vmem>>, vector<128x128xbf16>
    %cst_49 = arith.constant dense<0.000000e+00> : vector<8x128xf32>
    %53 = tpu.matmul %51, %52, %cst_49 {dimension_numbers = #tpu.dot_dimension_numbers<[1], [0], [0], [1], [0, 0, 1, 1], [], []>} : vector<8x128xbf16>, vector<128x128xbf16>, vector<8x128xf32> -> vector<8x128xf32>
    %c0_50 = arith.constant 0 : index
    %c0_51 = arith.constant 0 : index
    %54 = vector.load %arg9[%c0_50, %c0_51] : memref<1x128xf32, #tpu.memory_space<vmem>>, vector<1x128xf32>
    %55 = vector.broadcast %54 : vector<1x128xf32> to vector<8x128xf32>
    %56 = arith.addf %53, %55 : vector<8x128xf32>
    %c0_52 = arith.constant 0 : index
    %c0_53 = arith.constant 0 : index
    %57 = vector.load %arg10[%c0_52, %c0_53] : memref<8x128xf32, #tpu.memory_space<vmem>>, vector<8x128xf32>
    tpu.vector_store %arg10[%c0_52, %c0_53], %56 {strides = array<i32>} : memref<8x128xf32, #tpu.memory_space<vmem>>, vector<8x128xf32>,
    return
  }
  func.func @transform_0(%arg0: i32) -> (i32, i32) {
    %c0_i32 = arith.constant 0 : i32
    %c0_i32_0 = arith.constant 0 : i32
    return %arg0, %c0_i32 : i32, i32
  }
  func.func @transform_1(%arg0: i32) -> (i32, i32) {
    %c0_i32 = arith.constant 0 : i32
    %c0_i32_0 = arith.constant 0 : i32
    %c0_i32_1 = arith.constant 0 : i32
    return %c0_i32, %c0_i32_0 : i32, i32
  }
  func.func @transform_2(%arg0: i32) -> (i32, i32) {
    %c0_i32 = arith.constant 0 : i32
    %c0_i32_0 = arith.constant 0 : i32
    %c0_i32_1 = arith.constant 0 : i32
    return %c0_i32, %c0_i32_0 : i32, i32
  }
  func.func @transform_3(%arg0: i32) -> (i32, i32, i32) {
    %c0_i32 = arith.constant 0 : i32
    %c0_i32_0 = arith.constant 0 : i32
    %c0_i32_1 = arith.constant 0 : i32
    %c0_i32_2 = arith.constant 0 : i32
    return %c0_i32, %c0_i32_0, %c0_i32_1 : i32, i32, i32
  }
  func.func @transform_4(%arg0: i32) -> (i32, i32) {
    %c0_i32 = arith.constant 0 : i32
    %c0_i32_0 = arith.constant 0 : i32
    %c0_i32_1 = arith.constant 0 : i32
    return %c0_i32, %c0_i32_0 : i32, i32
  }
  func.func @transform_5(%arg0: i32) -> (i32, i32, i32) {
    %c0_i32 = arith.constant 0 : i32
    %c0_i32_0 = arith.constant 0 : i32
    %c0_i32_1 = arith.constant 0 : i32
    %c0_i32_2 = arith.constant 0 : i32
    return %c0_i32, %c0_i32_0, %c0_i32_1 : i32, i32, i32
  }
  func.func @transform_6(%arg0: i32) -> (i32, i32) {
    %c0_i32 = arith.constant 0 : i32
    %c0_i32_0 = arith.constant 0 : i32
    %c0_i32_1 = arith.constant 0 : i32
    return %c0_i32, %c0_i32_0 : i32, i32
  }
  func.func @transform_7(%arg0: i32) -> (i32, i32) {
    %c0_i32 = arith.constant 0 : i32
    %c0_i32_0 = arith.constant 0 : i32
    %c0_i32_1 = arith.constant 0 : i32
    return %c0_i32, %c0_i32_0 : i32, i32
  }
  func.func @transform_8(%arg0: i32) -> (i32, i32) {
    %c0_i32 = arith.constant 0 : i32
    %c0_i32_0 = arith.constant 0 : i32
    %c0_i32_1 = arith.constant 0 : i32
    return %c0_i32, %c0_i32_0 : i32, i32
  }
  func.func @transform_9(%arg0: i32) -> (i32, i32) {
    %c0_i32 = arith.constant 0 : i32
    %c0_i32_0 = arith.constant 0 : i32
    return %arg0, %c0_i32 : i32, i32
  }
}

</mosaic_0001>

<llo_original>
// kernel: tile.0
$region0: #{tile.0}
  %s0 = inlined_call_operand.vmem [shape: f32[8,22], index: 0, kind: input, shape index: {}]
  %s1 = inlined_call_operand.vmem [shape: f32[176,1], index: 1, kind: output, shape index: {}]
  %v2 = vld [vmem:[%s0] sm:$0xff]
  %vm3 = vcmask 7168
  %4 = vst.msk [vmem:[%s1] ss:$22 sm:$0xff] %vm3, %v2
  %v5 = vld.sshfl [vmem:[%s0] sm:$0xff pattern:$0x74152630]
  %6 = vrot.lane.b32.xlu0 %v5, 127
  %v7 = vpop.permute.xlu0 %6
  %vm8 = vcmask 7168
  %s9 = scalar_lea.vmem %s1, 1
  %10 = vst.msk [vmem:[%s9] ss:$66 sm:$0x7] %vm8, %v7
  %s11 = scalar_lea.vmem %s1, 4294967143
  %12 = vst.msk [vmem:[%s11] ss:$66 sm:$0x18] %vm8, %v7
  %s13 = scalar_lea.vmem %s1, 4294966989
  %14 = vst.msk [vmem:[%s13] ss:$66 sm:$0xe0] %vm8, %v7
  %v15 = vld.sshfl [vmem:[%s0] sm:$0xff pattern:$0x74152630]
  %16 = vrot.lane.b32.xlu0 %v15, 126
  %v17 = vpop.permute.xlu0 %16
  %vm18 = vcmask 7168
  %s19 = scalar_lea.vmem %s1, 2
  %20 = vst.msk [vmem:[%s19] ss:$66 sm:$0x7] %vm18, %v17
  %s21 = scalar_lea.vmem %s1, 4294967144
  %22 = vst.msk [vmem:[%s21] ss:$66 sm:$0x18] %vm18, %v17
  %s23 = scalar_lea.vmem %s1, 4294966990
  %24 = vst.msk [vmem:[%s23] ss:$66 sm:$0xe0] %vm18, %v17
  %v25 = vld.sshfl [vmem:[%s0] sm:$0xff pattern:$0x74152630]
  %26 = vrot.lane.b32.xlu0 %v25, 125
  %v27 = vpop.permute.xlu0 %26
  %vm28 = vcmask 7168
  %s29 = scalar_lea.vmem %s1, 3
  %30 = vst.msk [vmem:[%s29] ss:$66 sm:$0x7] %vm28, %v27
  %s31 = scalar_lea.vmem %s1, 4294967145
  %32 = vst.msk [vmem:[%s31] ss:$66 sm:$0x18] %vm28, %v27
  %s33 = scalar_lea.vmem %s1, 4294966991
  %34 = vst.msk [vmem:[%s33] ss:$66 sm:$0xe0] %vm28, %v27
  %v35 = vld.sshfl [vmem:[%s0] sm:$0xff pattern:$0x74152630]
  %36 = vrot.lane.b32.xlu0 %v35, 124
  %v37 = vpop.permute.xlu0 %36
  %vm38 = vcmask 7168
  %s39 = scalar_lea.vmem %s1, 4
  %40 = vst.msk [vmem:[%s39] ss:$66 sm:$0x7] %vm38, %v37
  %s41 = scalar_lea.vmem %s1, 4294967146
  %42 = vst.msk [vmem:[%s41] ss:$66 sm:$0x18] %vm38, %v37
  %s43 = scalar_lea.vmem %s1, 4294966992
  %44 = vst.msk [vmem:[%s43] ss:$66 sm:$0xe0] %vm38, %v37
  %v45 = vld.sshfl [vmem:[%s0] sm:$0xff pattern:$0x74152630]
  %46 = vrot.lane.b32.xlu0 %v45, 123
  %v47 = vpop.permute.xlu0 %46
  %vm48 = vcmask 7168
  %s49 = scalar_lea.vmem %s1, 5
  %50 = vst.msk [vmem:[%s49] ss:$66 sm:$0x7] %vm48, %v47
  %s51 = scalar_lea.vmem %s1, 4294967147
  %52 = vst.msk [vmem:[%s51] ss:$66 sm:$0x18] %vm48, %v47
  %s53 = scalar_lea.vmem %s1, 4294966993
  %54 = vst.msk [vmem:[%s53] ss:$66 sm:$0xe0] %vm48, %v47
  %v55 = vld.sshfl [vmem:[%s0] sm:$0xff pattern:$0x41526307]
  %56 = vrot.lane.b32.xlu0 %v55, 122
  %v57 = vpop.permute.xlu0 %56
  %vm58 = vcmask 7168
  %s59 = scalar_lea.vmem %s1, 160
  %60 = vst.msk [vmem:[%s59] ss:$-154 sm:$0x3] %vm58, %v57
  %s61 = scalar_lea.vmem %s1, 4294967236
  %62 = vst.msk [vmem:[%s61] ss:$66 sm:$0xc] %vm58, %v57
  %s63 = scalar_lea.vmem %s1, 4294967082
  %64 = vst.msk [vmem:[%s63] ss:$66 sm:$0x30] %vm58, %v57
  %s65 = scalar_lea.vmem %s1, 4294966928
  %66 = vst.msk [vmem:[%s65] ss:$66 sm:$0xc0] %vm58, %v57
  %v67 = vld.sshfl [vmem:[%s0] sm:$0xff pattern:$0x41526307]
  %68 = vrot.lane.b32.xlu0 %v67, 121
  %v69 = vpop.permute.xlu0 %68
  %vm70 = vcmask 7168
  %s71 = scalar_lea.vmem %s1, 161
  %72 = vst.msk [vmem:[%s71] ss:$-154 sm:$0x3] %vm70, %v69
  %s73 = scalar_lea.vmem %s1, 4294967237
  %74 = vst.msk [vmem:[%s73] ss:$66 sm:$0xc] %vm70, %v69
  %s75 = scalar_lea.vmem %s1, 4294967083
  %76 = vst.msk [vmem:[%s75] ss:$66 sm:$0x30] %vm70, %v69
  %s77 = scalar_lea.vmem %s1, 4294966929
  %78 = vst.msk [vmem:[%s77] ss:$66 sm:$0xc0] %vm70, %v69
  %v79 = vld.sshfl [vmem:[%s0] sm:$0xff pattern:$0x15263074]
  %80 = vrot.lane.b32.xlu0 %v79, 120
  %v81 = vpop.permute.xlu0 %80
  %vm82 = vcmask 7168
  %s83 = scalar_lea.vmem %s1, 96
  %84 = vst.msk [vmem:[%s83] ss:$66 sm:$0x3] %vm82, %v81
  %s85 = scalar_lea.vmem %s1, 4294967172
  %86 = vst.msk [vmem:[%s85] ss:$66 sm:$0x1c] %vm82, %v81
  %s87 = scalar_lea.vmem %s1, 4294967018
  %88 = vst.msk [vmem:[%s87] ss:$66 sm:$0x60] %vm82, %v81
  %s89 = scalar_lea.vmem %s1, 23
  %90 = vst.msk [vmem:[%s89] sm:$0x80] %vm82, %v81
  %v91 = vld.sshfl [vmem:[%s0] sm:$0xff pattern:$0x15263074]
  %92 = vrot.lane.b32.xlu0 %v91, 119
  %v93 = vpop.permute.xlu0 %92
  %vm94 = vcmask 7168
  %s95 = scalar_lea.vmem %s1, 97
  %96 = vst.msk [vmem:[%s95] ss:$66 sm:$0x3] %vm94, %v93
  %s97 = scalar_lea.vmem %s1, 4294967173
  %98 = vst.msk [vmem:[%s97] ss:$66 sm:$0x1c] %vm94, %v93
  %s99 = scalar_lea.vmem %s1, 4294967019
  %100 = vst.msk [vmem:[%s99] ss:$66 sm:$0x60] %vm94, %v93
  %s101 = scalar_lea.vmem %s1, 24
  %102 = vst.msk [vmem:[%s101] sm:$0x80] %vm94, %v93
  %v103 = vld.sshfl [vmem:[%s0] sm:$0xff pattern:$0x52630741]
  %104 = vrot.lane.b32.xlu0 %v103, 118
  %v105 = vpop.permute.xlu0 %104
  %vm106 = vcmask 7168
  %s107 = scalar_lea.vmem %s1, 32
  %108 = vst.msk [vmem:[%s107] ss:$66 sm:$0x7] %vm106, %v105
  %s109 = scalar_lea.vmem %s1, 4294967108
  %110 = vst.msk [vmem:[%s109] ss:$66 sm:$0x38] %vm106, %v105
  %s111 = scalar_lea.vmem %s1, 4294966954
  %112 = vst.msk [vmem:[%s111] ss:$66 sm:$0xc0] %vm106, %v105
  %v113 = vld.sshfl [vmem:[%s0] sm:$0xff pattern:$0x52630741]
  %114 = vrot.lane.b32.xlu0 %v113, 117
  %v115 = vpop.permute.xlu0 %114
  %vm116 = vcmask 7168
  %s117 = scalar_lea.vmem %s1, 33
  %118 = vst.msk [vmem:[%s117] ss:$66 sm:$0x7] %vm116, %v115
  %s119 = scalar_lea.vmem %s1, 4294967109
  %120 = vst.msk [vmem:[%s119] ss:$66 sm:$0x38] %vm116, %v115
  %s121 = scalar_lea.vmem %s1, 4294966955
  %122 = vst.msk [vmem:[%s121] ss:$66 sm:$0xc0] %vm116, %v115
  %v123 = vld.sshfl [vmem:[%s0] sm:$0xff pattern:$0x52630741]
  %124 = vrot.lane.b32.xlu0 %v123, 116
  %v125 = vpop.permute.xlu0 %124
  %vm126 = vcmask 7168
  %s127 = scalar_lea.vmem %s1, 34
  %128 = vst.msk [vmem:[%s127] ss:$66 sm:$0x7] %vm126, %v125
  %s129 = scalar_lea.vmem %s1, 4294967110
  %130 = vst.msk [vmem:[%s129] ss:$66 sm:$0x38] %vm126, %v125
  %s131 = scalar_lea.vmem %s1, 4294966956
  %132 = vst.msk [vmem:[%s131] ss:$66 sm:$0xc0] %vm126, %v125
  %v133 = vld.sshfl [vmem:[%s0] sm:$0xff pattern:$0x52630741]
  %134 = vrot.lane.b32.xlu0 %v133, 115
  %v135 = vpop.permute.xlu0 %134
  %vm136 = vcmask 7168
  %s137 = scalar_lea.vmem %s1, 35
  %138 = vst.msk [vmem:[%s137] ss:$66 sm:$0x7] %vm136, %v135
  %s139 = scalar_lea.vmem %s1, 4294967111
  %140 = vst.msk [vmem:[%s139] ss:$66 sm:$0x38] %vm136, %v135
  %s141 = scalar_lea.vmem %s1, 4294966957
  %142 = vst.msk [vmem:[%s141] ss:$66 sm:$0xc0] %vm136, %v135
  %v143 = vld.sshfl [vmem:[%s0] sm:$0xff pattern:$0x52630741]
  %144 = vrot.lane.b32.xlu0 %v143, 114
  %v145 = vpop.permute.xlu0 %144
  %vm146 = vcmask 7168
  %s147 = scalar_lea.vmem %s1, 36
  %148 = vst.msk [vmem:[%s147] ss:$66 sm:$0x7] %vm146, %v145
  %s149 = scalar_lea.vmem %s1, 4294967112
  %150 = vst.msk [vmem:[%s149] ss:$66 sm:$0x38] %vm146, %v145
  %s151 = scalar_lea.vmem %s1, 4294966958
  %152 = vst.msk [vmem:[%s151] ss:$66 sm:$0xc0] %vm146, %v145
  %v153 = vld.sshfl [vmem:[%s0] sm:$0xff pattern:$0x52630741]
  %154 = vrot.lane.b32.xlu0 %v153, 113
  %v155 = vpop.permute.xlu0 %154
  %vm156 = vcmask 7168
  %s157 = scalar_lea.vmem %s1, 37
  %158 = vst.msk [vmem:[%s157] ss:$66 sm:$0x7] %vm156, %v155
  %s159 = scalar_lea.vmem %s1, 4294967113
  %160 = vst.msk [vmem:[%s159] ss:$66 sm:$0x38] %vm156, %v155
  %s161 = scalar_lea.vmem %s1, 4294966959
  %162 = vst.msk [vmem:[%s161] ss:$66 sm:$0xc0] %vm156, %v155
  %v163 = vld.sshfl [vmem:[%s0] sm:$0xff pattern:$0x52630741]
  %164 = vrot.lane.b32.xlu0 %v163, 112
  %v165 = vpop.permute.xlu0 %164
  %vm166 = vcmask 7168
  %s167 = scalar_lea.vmem %s1, 38
  %168 = vst.msk [vmem:[%s167] ss:$66 sm:$0x7] %vm166, %v165
  %s169 = scalar_lea.vmem %s1, 4294967114
  %170 = vst.msk [vmem:[%s169] ss:$66 sm:$0x38] %vm166, %v165
  %s171 = scalar_lea.vmem %s1, 4294966960
  %172 = vst.msk [vmem:[%s171] ss:$66 sm:$0xc0] %vm166, %v165
  %v173 = vld.sshfl [vmem:[%s0] sm:$0xff pattern:$0x52630741]
  %174 = vrot.lane.b32.xlu0 %v173, 111
  %v175 = vpop.permute.xlu0 %174
  %vm176 = vcmask 7168
  %s177 = scalar_lea.vmem %s1, 39
  %178 = vst.msk [vmem:[%s177] ss:$66 sm:$0x7] %vm176, %v175
  %s179 = scalar_lea.vmem %s1, 4294967115
  %180 = vst.msk [vmem:[%s179] ss:$66 sm:$0x38] %vm176, %v175
  %s181 = scalar_lea.vmem %s1, 4294966961
  %182 = vst.msk [vmem:[%s181] ss:$66 sm:$0xc0] %vm176, %v175
  %v183 = vld.sshfl [vmem:[%s0] sm:$0xff pattern:$0x26307415]
  %184 = vrot.lane.b32.xlu0 %v183, 110
  %v185 = vpop.permute.xlu0 %184
  %vm186 = vcmask 7168
  %s187 = scalar_lea.vmem %s1, 128
  %188 = vst.msk [vmem:[%s187] ss:$-88 sm:$0x3] %vm186, %v185
  %s189 = scalar_lea.vmem %s1, 4294967270
  %190 = vst.msk [vmem:[%s189] ss:$66 sm:$0xc] %vm186, %v185
  %s191 = scalar_lea.vmem %s1, 4294967050
  %192 = vst.msk [vmem:[%s191] ss:$66 sm:$0x70] %vm186, %v185
  %s193 = scalar_lea.vmem %s1, 55
  %194 = vst.msk [vmem:[%s193] sm:$0x80] %vm186, %v185
  %v195 = vld.sshfl [vmem:[%s0] sm:$0xff pattern:$0x26307415]
  %196 = vrot.lane.b32.xlu0 %v195, 109
  %v197 = vpop.permute.xlu0 %196
  %vm198 = vcmask 7168
  %s199 = scalar_lea.vmem %s1, 129
  %200 = vst.msk [vmem:[%s199] ss:$-88 sm:$0x3] %vm198, %v197
  %s201 = scalar_lea.vmem %s1, 4294967271
  %202 = vst.msk [vmem:[%s201] ss:$66 sm:$0xc] %vm198, %v197
  %s203 = scalar_lea.vmem %s1, 4294967051
  %204 = vst.msk [vmem:[%s203] ss:$66 sm:$0x70] %vm198, %v197
  %s205 = scalar_lea.vmem %s1, 56
  %206 = vst.msk [vmem:[%s205] sm:$0x80] %vm198, %v197
  %v207 = vld.sshfl [vmem:[%s0] sm:$0xff pattern:$0x63074152]
  %208 = vrot.lane.b32.xlu0 %v207, 108
  %v209 = vpop.permute.xlu0 %208
  %vm210 = vcmask 7168
  %s211 = scalar_lea.vmem %s1, 64
  %212 = vst.msk [vmem:[%s211] ss:$66 sm:$0x3] %vm210, %v209
  %s213 = scalar_lea.vmem %s1, 4294967206
  %214 = vst.msk [vmem:[%s213] ss:$66 sm:$0x1c] %vm210, %v209
  %s215 = scalar_lea.vmem %s1, 4294966986
  %216 = vst.msk [vmem:[%s215] ss:$66 sm:$0xe0] %vm210, %v209
  %v217 = vld.sshfl [vmem:[%s0] sm:$0xff pattern:$0x63074152]
  %218 = vrot.lane.b32.xlu0 %v217, 107
  %v219 = vpop.permute.xlu0 %218
  %vm220 = vcmask 7168
  %s221 = scalar_lea.vmem %s1, 65
  %222 = vst.msk [vmem:[%s221] ss:$66 sm:$0x3] %vm220, %v219
  %s223 = scalar_lea.vmem %s1, 4294967207
  %224 = vst.msk [vmem:[%s223] ss:$66 sm:$0x1c] %vm220, %v219
  %s225 = scalar_lea.vmem %s1, 4294966987
  %226 = vst.msk [vmem:[%s225] ss:$66 sm:$0xe0] %vm220, %v219

// kernel: tcn_encoder_forward.1
$region0: #{tcn_encoder_forward.1}
  #allocation0 [shape = 'u32[]', space=smem, size = 0x4, offset = 0x4, fixed_abs, tag = 'smem constant byte address 0x4 - core index']
  #allocation1 [shape = 'u32[72,128]{1,0:T(1,128)}', space=vmem, size = 0x9000, scoped, tag = 'internal scratch']
  #allocation2 [shape = 'bf16[184,128]{1,0:T(8,128)(2,1)}', space=vmem, size = 0xb800, scoped, tag = 'scratch operand']
  %s0 = inlined_call_operand.vmem [shape: bf16[184,128], index: 0, kind: input, shape index: {}]
  %s1 = inlined_call_operand.vmem [shape: f32[176,1], index: 1, kind: input, shape index: {}]
  %s2 = inlined_call_operand.vmem [shape: f32[8,176], index: 2, kind: input, shape index: {}]
  %s3 = inlined_call_operand.vmem [shape: bf16[3,128,128], index: 3, kind: input, shape index: {}]
  %s4 = inlined_call_operand.vmem [shape: f32[1,128], index: 4, kind: input, shape index: {}]
  %s5 = inlined_call_operand.vmem [shape: bf16[3,128,128], index: 5, kind: input, shape index: {}]
  %s6 = inlined_call_operand.vmem [shape: f32[1,128], index: 6, kind: input, shape index: {}]
  %s7 = inlined_call_operand.vmem [shape: bf16[128,128], index: 7, kind: input, shape index: {}]
  %s8 = inlined_call_operand.vmem [shape: f32[1,128], index: 8, kind: input, shape index: {}]
  %s9 = inlined_call_operand.vmem [shape: f32[8,128], index: 9, kind: output, shape index: {}]
  %s10 = sld [smem:[#allocation0]]
  $region46: #{tcn_encoder_forward.1} parent=0
    _
  %s12 = ssub.s32 1, %s10
  %s13 = scalar_select 0, %s12, %s10
  // Predicated region
  $region2: #{tcn_encoder_forward.1} parent=0 // pred_check
    _
  $region3: #{tcn_encoder_forward.1} parent=0 // pred_check_branch
    %15 = sbr.rel (0) target = $region5
  $region4: #{tcn_encoder_forward.1} parent=0 // pred_region
    _
  $region5: #{tcn_encoder_forward.1} parent=0 // pred_fallthru
    _
  // Predicated region
  $region6: #{tcn_encoder_forward.1} parent=0 // pred_check
    _
  $region7: #{tcn_encoder_forward.1} parent=0 // pred_check_branch
    %17 = sbr.rel (0) target = $region9
  $region8: #{tcn_encoder_forward.1} parent=0 // pred_region
    _
  $region9: #{tcn_encoder_forward.1} parent=0 // pred_fallthru
    _
  // Predicated region
  $region10: #{tcn_encoder_forward.1} parent=0 // pred_check
    _
  $region11: #{tcn_encoder_forward.1} parent=0 // pred_check_branch
    %19 = sbr.rel (0) target = $region13
  $region12: #{tcn_encoder_forward.1} parent=0 // pred_region
    _
  $region13: #{tcn_encoder_forward.1} parent=0 // pred_fallthru
    _
  // Predicated region
  $region14: #{tcn_encoder_forward.1} parent=0 // pred_check
    _
  $region15: #{tcn_encoder_forward.1} parent=0 // pred_check_branch
    %21 = sbr.rel (0) target = $region17
  $region16: #{tcn_encoder_forward.1} parent=0 // pred_region
    _
  $region17: #{tcn_encoder_forward.1} parent=0 // pred_fallthru
    _
  // Predicated region
  $region18: #{tcn_encoder_forward.1} parent=0 // pred_check
    _
  $region19: #{tcn_encoder_forward.1} parent=0 // pred_check_branch
    %23 = sbr.rel (0) target = $region21
  $region20: #{tcn_encoder_forward.1} parent=0 // pred_region
    _
  $region21: #{tcn_encoder_forward.1} parent=0 // pred_fallthru
    _
  // Predicated region
  $region22: #{tcn_encoder_forward.1} parent=0 // pred_check
    _
  $region23: #{tcn_encoder_forward.1} parent=0 // pred_check_branch
    %25 = sbr.rel (0) target = $region25
  $region24: #{tcn_encoder_forward.1} parent=0 // pred_region
    _
  $region25: #{tcn_encoder_forward.1} parent=0 // pred_fallthru
    _
  // Predicated region
  $region26: #{tcn_encoder_forward.1} parent=0 // pred_check
    _
  $region27: #{tcn_encoder_forward.1} parent=0 // pred_check_branch
    %27 = sbr.rel (0) target = $region29
  $region28: #{tcn_encoder_forward.1} parent=0 // pred_region
    _
  $region29: #{tcn_encoder_forward.1} parent=0 // pred_fallthru
    _
  // Predicated region
  $region30: #{tcn_encoder_forward.1} parent=0 // pred_check
    _
  $region31: #{tcn_encoder_forward.1} parent=0 // pred_check_branch
    %29 = sbr.rel (0) target = $region33
  $region32: #{tcn_encoder_forward.1} parent=0 // pred_region
    _
  $region33: #{tcn_encoder_forward.1} parent=0 // pred_fallthru
    _
  // Predicated region
  $region34: #{tcn_encoder_forward.1} parent=0 // pred_check
    _
  $region35: #{tcn_encoder_forward.1} parent=0 // pred_check_branch
    %31 = sbr.rel (0) target = $region37
  $region36: #{tcn_encoder_forward.1} parent=0 // pred_region
    _
  $region37: #{tcn_encoder_forward.1} parent=0 // pred_fallthru
    _
  %v33 = vld [vmem:[%s1] sm:$0xff]
  %v34 = vld [vmem:[%s1 + $0x8] sm:$0xff]
  %v35 = vld [vmem:[%s1 + $0x10] sm:$0xff]
  %v36 = vld [vmem:[%s1 + $0x18] sm:$0xff]
  %v37 = vld [vmem:[%s1 + $0x20] sm:$0xff]
  %v38 = vld [vmem:[%s1 + $0x28] sm:$0xff]
  %v39 = vld [vmem:[%s1 + $0x30] sm:$0xff]
  %v40 = vld [vmem:[%s1 + $0x38] sm:$0xff]
  %v41 = vld [vmem:[%s1 + $0x40] sm:$0xff]
  %v42 = vld [vmem:[%s1 + $0x48] sm:$0xff]
  %v43 = vld [vmem:[%s1 + $0x50] sm:$0xff]
  %v44 = vld [vmem:[%s1 + $0x58] sm:$0xff]
  %v45 = vld [vmem:[%s1 + $0x60] sm:$0xff]
  %v46 = vld [vmem:[%s1 + $0x68] sm:$0xff]
  %v47 = vld [vmem:[%s1 + $0x70] sm:$0xff]
  %v48 = vld [vmem:[%s1 + $0x78] sm:$0xff]
  %v49 = vld [vmem:[%s1 + $0x80] sm:$0xff]
  %v50 = vld [vmem:[%s1 + $0x88] sm:$0xff]
  %v51 = vld [vmem:[%s1 + $0x90] sm:$0xff]
  %v52 = vld [vmem:[%s1 + $0x98] sm:$0xff]
  %v53 = vld [vmem:[%s1 + $0xa0] sm:$0xff]
  %v54 = vld [vmem:[%s1 + $0xa8] sm:$0xff]
  %55 = vst [vmem:[#allocation2] sm:$0xf] 0
  %v56 = vld [vmem:[%s0] sm:$0x8]
  %v57 = vld [vmem:[%s0 + $0x4] sm:$0xf]
  %v58 = vld [vmem:[%s0 + $0x8] sm:$0xf]
  %v59 = vld [vmem:[%s0 + $0xc] sm:$0xf]
  %v60 = vld [vmem:[%s0 + $0x10] sm:$0xf]
  %v61 = vld [vmem:[%s0 + $0x14] sm:$0xf]
  %v62 = vld [vmem:[%s0 + $0x18] sm:$0xf]
  %v63 = vld [vmem:[%s0 + $0x1c] sm:$0xf]
  %v64 = vld [vmem:[%s0 + $0x20] sm:$0xf]
  %v65 = vld [vmem:[%s0 + $0x24] sm:$0xf]
  %v66 = vld [vmem:[%s0 + $0x28] sm:$0xf]
  %v67 = vld [vmem:[%s0 + $0x2c] sm:$0xf]
  %v68 = vld [vmem:[%s0 + $0x30] sm:$0xf]
  %v69 = vld [vmem:[%s0 + $0x34] sm:$0xf]
  %v70 = vld [vmem:[%s0 + $0x38] sm:$0xf]
  %v71 = vld [vmem:[%s0 + $0x3c] sm:$0xf]
  %v72 = vld [vmem:[%s0 + $0x40] sm:$0xf]
  %v73 = vld [vmem:[%s0 + $0x44] sm:$0xf]
  %v74 = vld [vmem:[%s0 + $0x48] sm:$0xf]
  %v75 = vld [vmem:[%s0 + $0x4c] sm:$0xf]
  %v76 = vld [vmem:[%s0 + $0x50] sm:$0xf]
  %v77 = vld [vmem:[%s0 + $0x54] sm:$0xf]
  %v78 = vld [vmem:[%s0 + $0x58] sm:$0x7]
  %v79 = vld [vmem:[%s3] sm:$0xf]
  %v80 = vld [vmem:[%s3 + $0x4] sm:$0xf]
  %v81 = vld [vmem:[%s3 + $0x8] sm:$0xf]
  %v82 = vld [vmem:[%s3 + $0xc] sm:$0xf]
  %v83 = vld [vmem:[%s3 + $0x10] sm:$0xf]
  %v84 = vld [vmem:[%s3 + $0x14] sm:$0xf]
  %v85 = vld [vmem:[%s3 + $0x18] sm:$0xf]
  %v86 = vld [vmem:[%s3 + $0x1c] sm:$0xf]
  %v87 = vld [vmem:[%s3 + $0x20] sm:$0xf]
  %v88 = vld [vmem:[%s3 + $0x24] sm:$0xf]
  %v89 = vld [vmem:[%s3 + $0x28] sm:$0xf]
  %v90 = vld [vmem:[%s3 + $0x2c] sm:$0xf]
  %v91 = vld [vmem:[%s3 + $0x30] sm:$0xf]
  %v92 = vld [vmem:[%s3 + $0x34] sm:$0xf]
  %v93 = vld [vmem:[%s3 + $0x38] sm:$0xf]
  %v94 = vld [vmem:[%s3 + $0x3c] sm:$0xf]
  %v95 = vld [vmem:[%s0 + $0x58] sm:$0xf]
  %s96 = scalar_lea.vmem %s3, 64
  %v97 = vld [vmem:[%s96] sm:$0xf]
  %v98 = vld [vmem:[%s96 + $0x4] sm:$0xf]
  %v99 = vld [vmem:[%s96 + $0x8] sm:$0xf]
  %v100 = vld [vmem:[%s96 + $0xc] sm:$0xf]
  %v101 = vld [vmem:[%s96 + $0x10] sm:$0xf]
  %v102 = vld [vmem:[%s96 + $0x14] sm:$0xf]
  %v103 = vld [vmem:[%s96 + $0x18] sm:$0xf]
  %v104 = vld [vmem:[%s96 + $0x1c] sm:$0xf]
  %v105 = vld [vmem:[%s96 + $0x20] sm:$0xf]
  %v106 = vld [vmem:[%s96 + $0x24] sm:$0xf]
  %v107 = vld [vmem:[%s96 + $0x28] sm:$0xf]
  %v108 = vld [vmem:[%s96 + $0x2c] sm:$0xf]
  %v109 = vld [vmem:[%s96 + $0x30] sm:$0xf]
  %v110 = vld [vmem:[%s96 + $0x34] sm:$0xf]
  %v111 = vld [vmem:[%s96 + $0x38] sm:$0xf]
  %v112 = vld [vmem:[%s96 + $0x3c] sm:$0xf]
  %v136 = vunpack.c.l.b16 %v56
  %v137 = vunpack.c.l.b16 %v57
  %v138 = vunpack.c.l.b16 %v58
  %v139 = vunpack.c.l.b16 %v59
  %v140 = vunpack.c.l.b16 %v60
  %v141 = vunpack.c.l.b16 %v61
  %v142 = vunpack.c.l.b16 %v62
  %v143 = vunpack.c.l.b16 %v63
  %v144 = vunpack.c.l.b16 %v64
  %v145 = vunpack.c.l.b16 %v65
  %v146 = vunpack.c.l.b16 %v66
  %v147 = vunpack.c.l.b16 %v67
  %v148 = vunpack.c.l.b16 %v68
  %v149 = vunpack.c.l.b16 %v69
  %v150 = vunpack.c.l.b16 %v70
  %v151 = vunpack.c.l.b16 %v71
  %v152 = vunpack.c.l.b16 %v72
  %v153 = vunpack.c.l.b16 %v73
  %v154 = vunpack.c.l.b16 %v74
  %v155 = vunpack.c.l.b16 %v75
  %v156 = vunpack.c.l.b16 %v76
  %v157 = vunpack.c.l.b16 %v77
  %v158 = vunpack.c.l.b16 %v95
  %v159 = vpack.c.b16 %v137, %v136
  %v160 = vpack.c.b16 %v139, %v138
  %v161 = vpack.c.b16 %v141, %v140
  %v162 = vpack.c.b16 %v143, %v142
  %v163 = vpack.c.b16 %v145, %v144
  %v164 = vpack.c.b16 %v147, %v146
  %v165 = vpack.c.b16 %v149, %v148
  %v166 = vpack.c.b16 %v151, %v150
  %v167 = vpack.c.b16 %v153, %v152
  %v168 = vpack.c.b16 %v155, %v154
  %v169 = vpack.c.b16 %v157, %v156
  %v170 = vpack.c.b16 %v158, %v158
  %vm171 = vsmask.f32 4352
  %v173 = vshrl.u32 %v159, 16
  %v175 = vrot.slane %v173, 3
  %v176 = vshll.u32 %v159, 16
  %v178 = vrot.slane %v176, 4
  %v179 = vor.u32 %v175, %v178
  %v181 = vshrl.u32 %v160, 16
  %v183 = vrot.slane %v181, 3
  %v184 = vshll.u32 %v160, 16
  %v186 = vrot.slane %v184, 4
  %v187 = vor.u32 %v183, %v186
  %v188 = vsel %vm171, %v179, %v187
  %v190 = vshrl.u32 %v161, 16
  %v192 = vrot.slane %v190, 3
  %v193 = vshll.u32 %v161, 16
  %v195 = vrot.slane %v193, 4
  %v196 = vor.u32 %v192, %v195
  %v197 = vsel %vm171, %v187, %v196
  %v199 = vshrl.u32 %v162, 16
  %v201 = vrot.slane %v199, 3
  %v202 = vshll.u32 %v162, 16
  %v204 = vrot.slane %v202, 4
  %v205 = vor.u32 %v201, %v204
  %v206 = vsel %vm171, %v196, %v205
  %v208 = vshrl.u32 %v163, 16
  %v210 = vrot.slane %v208, 3
  %v211 = vshll.u32 %v163, 16
  %v213 = vrot.slane %v211, 4
  %v214 = vor.u32 %v210, %v213
  %v215 = vsel %vm171, %v205, %v214
  %v217 = vshrl.u32 %v164, 16
  %v219 = vrot.slane %v217, 3
  %v220 = vshll.u32 %v164, 16
  %v222 = vrot.slane %v220, 4
  %v223 = vor.u32 %v219, %v222
  %v224 = vsel %vm171, %v214, %v223
  %v226 = vshrl.u32 %v165, 16
  %v228 = vrot.slane %v226, 3
  %v229 = vshll.u32 %v165, 16
  %v231 = vrot.slane %v229, 4
  %v232 = vor.u32 %v228, %v231
  %v233 = vsel %vm171, %v223, %v232
  %v235 = vshrl.u32 %v166, 16
  %v237 = vrot.slane %v235, 3
  %v238 = vshll.u32 %v166, 16
  %v240 = vrot.slane %v238, 4
  %v241 = vor.u32 %v237, %v240
  %v242 = vsel %vm171, %v232, %v241
  %v244 = vshrl.u32 %v167, 16
  %v246 = vrot.slane %v244, 3
  %v247 = vshll.u32 %v167, 16
  %v249 = vrot.slane %v247, 4
  %v250 = vor.u32 %v246, %v249
  %v251 = vsel %vm171, %v241, %v250
  %v253 = vshrl.u32 %v168, 16
  %v255 = vrot.slane %v253, 3
  %v256 = vshll.u32 %v168, 16
  %v258 = vrot.slane %v256, 4
  %v259 = vor.u32 %v255, %v258
  %v260 = vsel %vm171, %v250, %v259
  %v262 = vshrl.u32 %v169, 16
  %v264 = vrot.slane %v262, 3
  %v265 = vshll.u32 %v169, 16
  %v267 = vrot.slane %v265, 4
  %v268 = vor.u32 %v264, %v267
  %v269 = vsel %vm171, %v259, %v268
  %v271 = vshrl.u32 %v170, 16
  %v273 = vrot.slane %v271, 3
  %v274 = vshll.u32 %v170, 16
  %v276 = vrot.slane %v274, 4
  %v277 = vor.u32 %v273, %v276
  %v278 = vsel %vm171, %v268, %v277
  %v306 = vunpack.c.l.b16 %v97
  %v307 = vunpack.c.l.b16 %v98
  %v308 = vunpack.c.l.b16 %v99
  %v309 = vunpack.c.l.b16 %v100
  %v310 = vunpack.c.l.b16 %v101
  %v311 = vunpack.c.l.b16 %v102
  %v312 = vunpack.c.l.b16 %v103
  %v313 = vunpack.c.l.b16 %v104
  %v314 = vunpack.c.l.b16 %v105
  %v315 = vunpack.c.l.b16 %v106
  %v316 = vunpack.c.l.b16 %v107
  %v317 = vunpack.c.l.b16 %v108
  %v318 = vunpack.c.l.b16 %v109
  %v319 = vunpack.c.l.b16 %v110
  %v320 = vunpack.c.l.b16 %v111
  %v321 = vunpack.c.l.b16 %v112
  %v322 = vpack.c.b16 %v307, %v306
  %v323 = vpack.c.b16 %v309, %v308
  %v324 = vpack.c.b16 %v311, %v310
  %v325 = vpack.c.b16 %v313, %v312
  %v326 = vpack.c.b16 %v315, %v314
  %v327 = vpack.c.b16 %v317, %v316
  %v328 = vpack.c.b16 %v319, %v318
  %v329 = vpack.c.b16 %v321, %v320
  %338 = vmatpush.bf16.msra.mxu0 %v329
  %339 = vmatpush.bf16.msra.mxu0 %v328
  %340 = vmatpush.bf16.msra.mxu0 %v327
  %341 = vmatpush.bf16.msra.mxu0 %v326
  %342 = vmatpush.bf16.msra.mxu0 %v325
  %343 = vmatpush.bf16.msra.mxu0 %v324
  %344 = vmatpush.bf16.msra.mxu0 %v323
  %345 = vmatpush.bf16.msra.mxu0 %v322
  %346 = vmatmul.bf16.gmra.mxu0 %v188
  %v347 = vpop.f32.mrf.mxu0
  %v348 = vadd.f32 0.0, %v347
  %v349 = vpop.f32.mrf.mxu0
  %v350 = vadd.f32 0.0, %v349
  %351 = vmatmul.bf16.gmra.mxu0 %v197
  %v352 = vpop.f32.mrf.mxu0
  %v353 = vadd.f32 0.0, %v352
  %v354 = vpop.f32.mrf.mxu0
  %v355 = vadd.f32 0.0, %v354
  %356 = vmatmul.bf16.gmra.mxu0 %v206
  %v357 = vpop.f32.mrf.mxu0
  %v358 = vadd.f32 0.0, %v357
  %v359 = vpop.f32.mrf.mxu0
  %v360 = vadd.f32 0.0, %v359
  %361 = vmatmul.bf16.gmra.mxu0 %v215
  %v362 = vpop.f32.mrf.mxu0
  %v363 = vadd.f32 0.0, %v362
  %v364 = vpop.f32.mrf.mxu0
  %v365 = vadd.f32 0.0, %v364
  %366 = vmatmul.bf16.gmra.mxu0 %v224
  %v367 = vpop.f32.mrf.mxu0
  %v368 = vadd.f32 0.0, %v367
  %v369 = vpop.f32.mrf.mxu0
  %v370 = vadd.f32 0.0, %v369
  %371 = vmatmul.bf16.gmra.mxu0 %v233
  %v372 = vpop.f32.mrf.mxu0
  %v373 = vadd.f32 0.0, %v372
  %v374 = vpop.f32.mrf.mxu0
  %v375 = vadd.f32 0.0, %v374
  %376 = vmatmul.bf16.gmra.mxu0 %v242
  %v377 = vpop.f32.mrf.mxu0
  %v378 = vadd.f32 0.0, %v377
  %v379 = vpop.f32.mrf.mxu0
  %v380 = vadd.f32 0.0, %v379
  %381 = vmatmul.bf16.gmra.mxu0 %v251
  %v382 = vpop.f32.mrf.mxu0
  %v383 = vadd.f32 0.0, %v382
  %v384 = vpop.f32.mrf.mxu0
  %v385 = vadd.f32 0.0, %v384
  %386 = vmatmul.bf16.gmra.mxu0 %v260
  %v387 = vpop.f32.mrf.mxu0
  %v388 = vadd.f32 0.0, %v387
  %v389 = vpop.f32.mrf.mxu0
  %v390 = vadd.f32 0.0, %v389
  %391 = vmatmul.bf16.gmra.mxu0 %v269
  %v392 = vpop.f32.mrf.mxu0
  %v393 = vadd.f32 0.0, %v392
  %v394 = vpop.f32.mrf.mxu0
  %v395 = vadd.f32 0.0, %v394
  %396 = vmatmul.bf16.gmra.mxu0 %v278
  %v397 = vpop.f32.mrf.mxu0
  %v398 = vadd.f32 0.0, %v397
  %v399 = vpop.f32.mrf.mxu0
  %v400 = vadd.f32 0.0, %v399
  %401 = vdwg.mxu0
  %v403 = vunpack.c.l.b16 %v78
  %v404 = vpack.c.b16 %v403, %v403
  %vm405 = vcmask 1044480
  %v406 = vrot.slane %v159, 3
  %v407 = vrot.slane %v160, 3
  %v408 = vsel %vm405, %v406, %v407
  %v409 = vrot.slane %v161, 3
  %v410 = vsel %vm405, %v407, %v409
  %v411 = vrot.slane %v162, 3
  %v412 = vsel %vm405, %v409, %v411
  %v413 = vrot.slane %v163, 3
  %v414 = vsel %vm405, %v411, %v413
  %v415 = vrot.slane %v164, 3
  %v416 = vsel %vm405, %v413, %v415
  %v417 = vrot.slane %v165, 3
  %v418 = vsel %vm405, %v415, %v417
  %v419 = vrot.slane %v166, 3
  %v420 = vsel %vm405, %v417, %v419
  %v421 = vrot.slane %v167, 3
  %v422 = vsel %vm405, %v419, %v421
  %v423 = vrot.slane %v168, 3
  %v424 = vsel %vm405, %v421, %v423
  %v425 = vrot.slane %v169, 3
  %v426 = vsel %vm405, %v423, %v425
  %v427 = vrot.slane %v404, 3
  %v428 = vsel %vm405, %v425, %v427
  %v456 = vunpack.c.l.b16 %v79
  %v457 = vunpack.c.l.b16 %v80
  %v458 = vunpack.c.l.b16 %v81
  %v459 = vunpack.c.l.b16 %v82
  %v460 = vunpack.c.l.b16 %v83
  %v461 = vunpack.c.l.b16 %v84
  %v462 = vunpack.c.l.b16 %v85
  %v463 = vunpack.c.l.b16 %v86
  %v464 = vunpack.c.l.b16 %v87
  %v465 = vunpack.c.l.b16 %v88
  %v466 = vunpack.c.l.b16 %v89
  %v467 = vunpack.c.l.b16 %v90
  %v468 = vunpack.c.l.b16 %v91
  %v469 = vunpack.c.l.b16 %v92
  %v470 = vunpack.c.l.b16 %v93
  %v471 = vunpack.c.l.b16 %v94
  %v472 = vpack.c.b16 %v457, %v456
  %v473 = vpack.c.b16 %v459, %v458
  %v474 = vpack.c.b16 %v461, %v460
  %v475 = vpack.c.b16 %v463, %v462
  %v476 = vpack.c.b16 %v465, %v464
  %v477 = vpack.c.b16 %v467, %v466
  %v478 = vpack.c.b16 %v469, %v468
  %v479 = vpack.c.b16 %v471, %v470
  %488 = vmatpush.bf16.msra.mxu0 %v479
  %489 = vmatpush.bf16.msra.mxu0 %v478
  %490 = vmatpush.bf16.msra.mxu0 %v477
  %491 = vmatpush.bf16.msra.mxu0 %v476
  %492 = vmatpush.bf16.msra.mxu0 %v475
  %493 = vmatpush.bf16.msra.mxu0 %v474
  %494 = vmatpush.bf16.msra.mxu0 %v473
  %495 = vmatpush.bf16.msra.mxu0 %v472
  %496 = vmatmul.bf16.gmra.mxu0 %v408
  %v497 = vpop.f32.mrf.mxu0
  %v498 = vadd.f32 %v348, %v497
  %v499 = vpop.f32.mrf.mxu0
  %v500 = vadd.f32 %v350, %v499
  %501 = vmatmul.bf16.gmra.mxu0 %v410
  %v502 = vpop.f32.mrf.mxu0
  %v503 = vadd.f32 %v353, %v502
  %v504 = vpop.f32.mrf.mxu0
  %v505 = vadd.f32 %v355, %v504
  %506 = vmatmul.bf16.gmra.mxu0 %v412
  %v507 = vpop.f32.mrf.mxu0
  %v508 = vadd.f32 %v358, %v507
  %v509 = vpop.f32.mrf.mxu0
  %v510 = vadd.f32 %v360, %v509
  %511 = vmatmul.bf16.gmra.mxu0 %v414
  %v512 = vpop.f32.mrf.mxu0
  %v513 = vadd.f32 %v363, %v512
  %v514 = vpop.f32.mrf.mxu0
  %v515 = vadd.f32 %v365, %v514
  %516 = vmatmul.bf16.gmra.mxu0 %v416
  %v517 = vpop.f32.mrf.mxu0
  %v518 = vadd.f32 %v368, %v517
  %v519 = vpop.f32.mrf.mxu0
  %v520 = vadd.f32 %v370, %v519
  %521 = vmatmul.bf16.gmra.mxu0 %v418
  %v522 = vpop.f32.mrf.mxu0
  %v523 = vadd.f32 %v373, %v522
  %v524 = vpop.f32.mrf.mxu0
  %v525 = vadd.f32 %v375, %v524
  %526 = vmatmul.bf16.gmra.mxu0 %v420
  %v527 = vpop.f32.mrf.mxu0
  %v528 = vadd.f32 %v378, %v527
  %v529 = vpop.f32.mrf.mxu0
  %v530 = vadd.f32 %v380, %v529
  %531 = vmatmul.bf16.gmra.mxu0 %v422
  %v532 = vpop.f32.mrf.mxu0
  %v533 = vadd.f32 %v383, %v532
  %v534 = vpop.f32.mrf.mxu0
  %v535 = vadd.f32 %v385, %v534
  %536 = vmatmul.bf16.gmra.mxu0 %v424
  %v537 = vpop.f32.mrf.mxu0
  %v538 = vadd.f32 %v388, %v537
  %v539 = vpop.f32.mrf.mxu0
  %v540 = vadd.f32 %v390, %v539
  %541 = vmatmul.bf16.gmra.mxu0 %v426
  %v542 = vpop.f32.mrf.mxu0
  %v543 = vadd.f32 %v393, %v542
  %v544 = vpop.f32.mrf.mxu0
  %v545 = vadd.f32 %v395, %v544
  %546 = vmatmul.bf16.gmra.mxu0 %v428
  %v547 = vpop.f32.mrf.mxu0
  %v548 = vadd.f32 %v398, %v547
  %v549 = vpop.f32.mrf.mxu0
  %v550 = vadd.f32 %v400, %v549
  %551 = vdwg.mxu0
  %s552 = scalar_lea.vmem %s3, 128
  %v553 = vld [vmem:[%s552] sm:$0xf]
  %v554 = vld [vmem:[%s552 + $0x4] sm:$0xf]
  %v555 = vld [vmem:[%s552 + $0x8] sm:$0xf]
  %v556 = vld [vmem:[%s552 + $0xc] sm:$0xf]
  %v557 = vld [vmem:[%s552 + $0x10] sm:$0xf]
  %v558 = vld [vmem:[%s552 + $0x14] sm:$0xf]
  %v559 = vld [vmem:[%s552 + $0x18] sm:$0xf]
  %v560 = vld [vmem:[%s552 + $0x1c] sm:$0xf]
  %v561 = vld [vmem:[%s552 + $0x20] sm:$0xf]
  %v562 = vld [vmem:[%s552 + $0x24] sm:$0xf]
  %v563 = vld [vmem:[%s552 + $0x28] sm:$0xf]
  %v564 = vld [vmem:[%s552 + $0x2c] sm:$0xf]
  %v565 = vld [vmem:[%s552 + $0x30] sm:$0xf]
  %v566 = vld [vmem:[%s552 + $0x34] sm:$0xf]
  %v567 = vld [vmem:[%s552 + $0x38] sm:$0xf]
  %v568 = vld [vmem:[%s552 + $0x3c] sm:$0xf]
  %v569 = vpack.c.b16 %v138, %v137
  %v570 = vpack.c.b16 %v140, %v139
  %v571 = vpack.c.b16 %v142, %v141
  %v572 = vpack.c.b16 %v144, %v143
  %v573 = vpack.c.b16 %v146, %v145
  %v574 = vpack.c.b16 %v148, %v147
  %v575 = vpack.c.b16 %v150, %v149
  %v576 = vpack.c.b16 %v152, %v151
  %v577 = vpack.c.b16 %v154, %v153
  %v578 = vpack.c.b16 %v156, %v155
  %v579 = vpack.c.b16 %v158, %v157
  %v607 = vunpack.c.l.b16 %v553
  %v608 = vunpack.c.l.b16 %v554
  %v609 = vunpack.c.l.b16 %v555
  %v610 = vunpack.c.l.b16 %v556
  %v611 = vunpack.c.l.b16 %v557
  %v612 = vunpack.c.l.b16 %v558
  %v613 = vunpack.c.l.b16 %v559
  %v614 = vunpack.c.l.b16 %v560
  %v615 = vunpack.c.l.b16 %v561
  %v616 = vunpack.c.l.b16 %v562
  %v617 = vunpack.c.l.b16 %v563
  %v618 = vunpack.c.l.b16 %v564
  %v619 = vunpack.c.l.b16 %v565
  %v620 = vunpack.c.l.b16 %v566
  %v621 = vunpack.c.l.b16 %v567
  %v622 = vunpack.c.l.b16 %v568
  %v623 = vpack.c.b16 %v608, %v607
  %v624 = vpack.c.b16 %v610, %v609
  %v625 = vpack.c.b16 %v612, %v611
  %v626 = vpack.c.b16 %v614, %v613
  %v627 = vpack.c.b16 %v616, %v615
  %v628 = vpack.c.b16 %v618, %v617
  %v629 = vpack.c.b16 %v620, %v619
  %v630 = vpack.c.b16 %v622, %v621
  %639 = vmatpush.bf16.msra.mxu0 %v630
  %640 = vmatpush.bf16.msra.mxu0 %v629
  %641 = vmatpush.bf16.msra.mxu0 %v628
  %642 = vmatpush.bf16.msra.mxu0 %v627
  %643 = vmatpush.bf16.msra.mxu0 %v626
  %644 = vmatpush.bf16.msra.mxu0 %v625
  %645 = vmatpush.bf16.msra.mxu0 %v624
  %646 = vmatpush.bf16.msra.mxu0 %v623
  %647 = vmatmul.bf16.gmra.mxu0 %v569
  %v648 = vpop.f32.mrf.mxu0
  %v649 = vadd.f32 0.0, %v648
  %v650 = vpop.f32.mrf.mxu0
  %v651 = vadd.f32 0.0, %v650
  %652 = vmatmul.bf16.gmra.mxu0 %v570
  %v653 = vpop.f32.mrf.mxu0
  %v654 = vadd.f32 0.0, %v653
  %v655 = vpop.f32.mrf.mxu0
  %v656 = vadd.f32 0.0, %v655
  %657 = vmatmul.bf16.gmra.mxu0 %v571
  %v658 = vpop.f32.mrf.mxu0
  %v659 = vadd.f32 0.0, %v658
  %v660 = vpop.f32.mrf.mxu0
  %v661 = vadd.f32 0.0, %v660
  %662 = vmatmul.bf16.gmra.mxu0 %v572
  %v663 = vpop.f32.mrf.mxu0
  %v664 = vadd.f32 0.0, %v663
  %v665 = vpop.f32.mrf.mxu0
  %v666 = vadd.f32 0.0, %v665
  %667 = vmatmul.bf16.gmra.mxu0 %v573
  %v668 = vpop.f32.mrf.mxu0
  %v669 = vadd.f32 0.0, %v668
  %v670 = vpop.f32.mrf.mxu0
  %v671 = vadd.f32 0.0, %v670
  %672 = vmatmul.bf16.gmra.mxu0 %v574
  %v673 = vpop.f32.mrf.mxu0
  %v674 = vadd.f32 0.0, %v673
  %v675 = vpop.f32.mrf.mxu0
  %v676 = vadd.f32 0.0, %v675
  %677 = vmatmul.bf16.gmra.mxu0 %v575
  %v678 = vpop.f32.mrf.mxu0
  %v679 = vadd.f32 0.0, %v678
  %v680 = vpop.f32.mrf.mxu0
  %v681 = vadd.f32 0.0, %v680
  %682 = vmatmul.bf16.gmra.mxu0 %v576
  %v683 = vpop.f32.mrf.mxu0
  %v684 = vadd.f32 0.0, %v683
  %v685 = vpop.f32.mrf.mxu0
  %v686 = vadd.f32 0.0, %v685
  %687 = vmatmul.bf16.gmra.mxu0 %v577
  %v688 = vpop.f32.mrf.mxu0
  %v689 = vadd.f32 0.0, %v688
  %v690 = vpop.f32.mrf.mxu0
  %v691 = vadd.f32 0.0, %v690
  %692 = vmatmul.bf16.gmra.mxu0 %v578
  %v693 = vpop.f32.mrf.mxu0
  %v694 = vadd.f32 0.0, %v693
  %v695 = vpop.f32.mrf.mxu0
  %v696 = vadd.f32 0.0, %v695
  %697 = vmatmul.bf16.gmra.mxu0 %v579
  %v698 = vpop.f32.mrf.mxu0
  %v699 = vadd.f32 0.0, %v698
  %v700 = vpop.f32.mrf.mxu0
  %v701 = vadd.f32 0.0, %v700
  %702 = vdwg.mxu0
  %v703 = vadd.f32 %v498, %v649
  %v704 = vadd.f32 %v500, %v651
  %v705 = vadd.f32 %v503, %v654
  %v706 = vadd.f32 %v505, %v656
  %v707 = vadd.f32 %v508, %v659
  %v708 = vadd.f32 %v510, %v661
  %v709 = vadd.f32 %v513, %v664
  %v710 = vadd.f32 %v515, %v666
  %v711 = vadd.f32 %v518, %v669
  %v712 = vadd.f32 %v520, %v671
  %v713 = vadd.f32 %v523, %v674
  %v714 = vadd.f32 %v525, %v676
  %v715 = vadd.f32 %v528, %v679
  %v716 = vadd.f32 %v530, %v681
  %v717 = vadd.f32 %v533, %v684
  %v718 = vadd.f32 %v535, %v686
  %v719 = vadd.f32 %v538, %v689
  %v720 = vadd.f32 %v540, %v691
  %v721 = vadd.f32 %v543, %v694
  %v722 = vadd.f32 %v545, %v696
  %v723 = vadd.f32 %v548, %v699
  %v724 = vadd.f32 %v550, %v701
  %v725 = vld [vmem:[%s4] sm:$0x1]
  %v727 = vperm.slane %v725, 0
  %v729 = vadd.f32 %v703, %v727
  %v730 = vadd.f32 %v704, %v727
  %v731 = vadd.f32 %v705, %v727
  %v732 = vadd.f32 %v706, %v727
  %v733 = vadd.f32 %v707, %v727
  %v734 = vadd.f32 %v708, %v727
  %v735 = vadd.f32 %v709, %v727
  %v736 = vadd.f32 %v710, %v727
  %v737 = vadd.f32 %v711, %v727
  %v738 = vadd.f32 %v712, %v727
  %v739 = vadd.f32 %v713, %v727
  %v740 = vadd.f32 %v714, %v727
  %v741 = vadd.f32 %v715, %v727
  %v742 = vadd.f32 %v716, %v727
  %v743 = vadd.f32 %v717, %v727
  %v744 = vadd.f32 %v718, %v727
  %v745 = vadd.f32 %v719, %v727
  %v746 = vadd.f32 %v720, %v727
  %v747 = vadd.f32 %v721, %v727
  %v748 = vadd.f32 %v722, %v727
  %v749 = vadd.f32 %v723, %v727
  %v750 = vadd.f32 %v724, %v727
  %v751 = vmax.f32 %v729, 0.0
  %v752 = vmax.f32 %v730, 0.0
  %v753 = vmax.f32 %v731, 0.0
  %v754 = vmax.f32 %v732, 0.0
  %v755 = vmax.f32 %v733, 0.0
  %v756 = vmax.f32 %v734, 0.0
  %v757 = vmax.f32 %v735, 0.0
  %v758 = vmax.f32 %v736, 0.0
  %v759 = vmax.f32 %v737, 0.0
  %v760 = vmax.f32 %v738, 0.0
  %v761 = vmax.f32 %v739, 0.0
  %v762 = vmax.f32 %v740, 0.0
  %v763 = vmax.f32 %v741, 0.0
  %v764 = vmax.f32 %v742, 0.0
  %v765 = vmax.f32 %v743, 0.0
  %v766 = vmax.f32 %v744, 0.0
  %v767 = vmax.f32 %v745, 0.0
  %v768 = vmax.f32 %v746, 0.0
  %v769 = vmax.f32 %v747, 0.0
  %v770 = vmax.f32 %v748, 0.0
  %v771 = vmax.f32 %v749, 0.0
  %v772 = vmax.f32 %v750, 0.0
  %vm773 = vcmp.lt.f32.partialorder %v33, 18.0
  %vm774 = vcmp.lt.f32.partialorder %v34, 18.0
  %vm775 = vcmp.lt.f32.partialorder %v35, 18.0
  %vm776 = vcmp.lt.f32.partialorder %v36, 18.0
  %vm777 = vcmp.lt.f32.partialorder %v37, 18.0
  %vm778 = vcmp.lt.f32.partialorder %v38, 18.0
  %vm779 = vcmp.lt.f32.partialorder %v39, 18.0
  %vm780 = vcmp.lt.f32.partialorder %v40, 18.0
  %vm781 = vcmp.lt.f32.partialorder %v41, 18.0
  %vm782 = vcmp.lt.f32.partialorder %v42, 18.0
  %vm783 = vcmp.lt.f32.partialorder %v43, 18.0
  %vm784 = vcmp.lt.f32.partialorder %v44, 18.0
  %vm785 = vcmp.lt.f32.partialorder %v45, 18.0
  %vm786 = vcmp.lt.f32.partialorder %v46, 18.0
  %vm787 = vcmp.lt.f32.partialorder %v47, 18.0
  %vm788 = vcmp.lt.f32.partialorder %v48, 18.0
  %vm789 = vcmp.lt.f32.partialorder %v49, 18.0
  %vm790 = vcmp.lt.f32.partialorder %v50, 18.0
  %vm791 = vcmp.lt.f32.partialorder %v51, 18.0
  %vm792 = vcmp.lt.f32.partialorder %v52, 18.0
  %vm793 = vcmp.lt.f32.partialorder %v53, 18.0
  %vm794 = vcmp.lt.f32.partialorder %v54, 18.0
  %v795 = vsel %vm773, 1, 0
  %v796 = vsel %vm774, 1, 0
  %v797 = vsel %vm775, 1, 0
  %v798 = vsel %vm776, 1, 0
  %v799 = vsel %vm777, 1, 0
  %v800 = vsel %vm778, 1, 0
  %v801 = vsel %vm779, 1, 0
  %v802 = vsel %vm780, 1, 0
  %v803 = vsel %vm781, 1, 0
  %v804 = vsel %vm782, 1, 0
  %v805 = vsel %vm783, 1, 0
  %v806 = vsel %vm784, 1, 0
  %v807 = vsel %vm785, 1, 0
  %v808 = vsel %vm786, 1, 0
  %v809 = vsel %vm787, 1, 0
  %v810 = vsel %vm788, 1, 0
  %v811 = vsel %vm789, 1, 0
  %v812 = vsel %vm790, 1, 0
  %v813 = vsel %vm791, 1, 0
  %v814 = vsel %vm792, 1, 0
  %v815 = vsel %vm793, 1, 0
  %v816 = vsel %vm794, 1, 0
  %817 = vset.pattern.permute.xlu0 0
  %818 = vperm.xlu0 %817, %v795
  %v819 = vpop.permute.xlu0 %818
  %820 = vset.pattern.permute.xlu0 0
  %821 = vperm.xlu0 %820, %v796
  %v822 = vpop.permute.xlu0 %821
  %823 = vset.pattern.permute.xlu0 0
  %824 = vperm.xlu0 %823, %v797
  %v825 = vpop.permute.xlu0 %824
  %826 = vset.pattern.permute.xlu0 0
  %827 = vperm.xlu0 %826, %v798
  %v828 = vpop.permute.xlu0 %827
  %829 = vset.pattern.permute.xlu0 0
  %830 = vperm.xlu0 %829, %v799
  %v831 = vpop.permute.xlu0 %830
  %832 = vset.pattern.permute.xlu0 0
  %833 = vperm.xlu0 %832, %v800
  %v834 = vpop.permute.xlu0 %833
  %835 = vset.pattern.permute.xlu0 0
  %836 = vperm.xlu0 %835, %v801
  %v837 = vpop.permute.xlu0 %836
  %838 = vset.pattern.permute.xlu0 0
  %839 = vperm.xlu0 %838, %v802
  %v840 = vpop.permute.xlu0 %839
  %841 = vset.pattern.permute.xlu0 0
  %842 = vperm.xlu0 %841, %v803
  %v843 = vpop.permute.xlu0 %842
  %844 = vset.pattern.permute.xlu0 0
  %845 = vperm.xlu0 %844, %v804
  %v846 = vpop.permute.xlu0 %845
  %847 = vset.pattern.permute.xlu0 0
  %848 = vperm.xlu0 %847, %v805
  %v849 = vpop.permute.xlu0 %848
  %850 = vset.pattern.permute.xlu0 0
  %851 = vperm.xlu0 %850, %v806
  %v852 = vpop.permute.xlu0 %851
  %853 = vset.pattern.permute.xlu0 0
  %854 = vperm.xlu0 %853, %v807
  %v855 = vpop.permute.xlu0 %854
  %856 = vset.pattern.permute.xlu0 0
  %857 = vperm.xlu0 %856, %v808
  %v858 = vpop.permute.xlu0 %857
  %859 = vset.pattern.permute.xlu0 0
  %860 = vperm.xlu0 %859, %v809
  %v861 = vpop.permute.xlu0 %860
  %862 = vset.pattern.permute.xlu0 0
  %863 = vperm.xlu0 %862, %v810
  %v864 = vpop.permute.xlu0 %863
  %865 = vset.pattern.permute.xlu0 0
  %866 = vperm.xlu0 %865, %v811
  %v867 = vpop.permute.xlu0 %866
  %868 = vset.pattern.permute.xlu0 0
  %869 = vperm.xlu0 %868, %v812
  %v870 = vpop.permute.xlu0 %869
  %871 = vset.pattern.permute.xlu0 0
  %872 = vperm.xlu0 %871, %v813
  %v873 = vpop.permute.xlu0 %872
  %874 = vset.pattern.permute.xlu0 0
  %875 = vperm.xlu0 %874, %v814
  %v876 = vpop.permute.xlu0 %875
  %877 = vset.pattern.permute.xlu0 0
  %878 = vperm.xlu0 %877, %v815
  %v879 = vpop.permute.xlu0 %878
  %880 = vset.pattern.permute.xlu0 0
  %881 = vperm.xlu0 %880, %v816
  %v882 = vpop.permute.xlu0 %881
  %vm883 = vcmp.eq.s32.totalorder %v819, 1
  %vm884 = vcmp.eq.s32.totalorder %v822, 1
  %vm885 = vcmp.eq.s32.totalorder %v825, 1
  %vm886 = vcmp.eq.s32.totalorder %v828, 1
  %vm887 = vcmp.eq.s32.totalorder %v831, 1
  %vm888 = vcmp.eq.s32.totalorder %v834, 1
  %vm889 = vcmp.eq.s32.totalorder %v837, 1
  %vm890 = vcmp.eq.s32.totalorder %v840, 1
  %vm891 = vcmp.eq.s32.totalorder %v843, 1
  %vm892 = vcmp.eq.s32.totalorder %v846, 1
  %vm893 = vcmp.eq.s32.totalorder %v849, 1
  %vm894 = vcmp.eq.s32.totalorder %v852, 1
  %vm895 = vcmp.eq.s32.totalorder %v855, 1
  %vm896 = vcmp.eq.s32.totalorder %v858, 1
  %vm897 = vcmp.eq.s32.totalorder %v861, 1
  %vm898 = vcmp.eq.s32.totalorder %v864, 1
  %vm899 = vcmp.eq.s32.totalorder %v867, 1
  %vm900 = vcmp.eq.s32.totalorder %v870, 1
  %vm901 = vcmp.eq.s32.totalorder %v873, 1
  %vm902 = vcmp.eq.s32.totalorder %v876, 1
  %vm903 = vcmp.eq.s32.totalorder %v879, 1
  %vm904 = vcmp.eq.s32.totalorder %v882, 1
  %v905 = vsel %vm883, %v751, 0.0
  %v906 = vsel %vm884, %v752, 0.0
  %v907 = vsel %vm885, %v753, 0.0
  %v908 = vsel %vm886, %v754, 0.0
  %v909 = vsel %vm887, %v755, 0.0
  %v910 = vsel %vm888, %v756, 0.0
  %v911 = vsel %vm889, %v757, 0.0
  %v912 = vsel %vm890, %v758, 0.0
  %v913 = vsel %vm891, %v759, 0.0
  %v914 = vsel %vm892, %v760, 0.0
  %v915 = vsel %vm893, %v761, 0.0
  %v916 = vsel %vm894, %v762, 0.0
  %v917 = vsel %vm895, %v763, 0.0
  %v918 = vsel %vm896, %v764, 0.0
  %v919 = vsel %vm897, %v765, 0.0
  %v920 = vsel %vm898, %v766, 0.0
  %v921 = vsel %vm899, %v767, 0.0
  %v922 = vsel %vm900, %v768, 0.0
  %v923 = vsel %vm901, %v769, 0.0
  %v924 = vsel %vm902, %v770, 0.0
  %v925 = vsel %vm903, %v771, 0.0
  %v926 = vsel %vm904, %v772, 0.0
  %v927 = vpack.c.bf16 %v905, %v905
  %v928 = vpack.c.bf16 %v906, %v906
  %v929 = vpack.c.bf16 %v907, %v907
  %v930 = vpack.c.bf16 %v908, %v908
  %v931 = vpack.c.bf16 %v909, %v909
  %v932 = vpack.c.bf16 %v910, %v910
  %v933 = vpack.c.bf16 %v911, %v911
  %v934 = vpack.c.bf16 %v912, %v912
  %v935 = vpack.c.bf16 %v913, %v913
  %v936 = vpack.c.bf16 %v914, %v914
  %v937 = vpack.c.bf16 %v915, %v915
  %v938 = vpack.c.bf16 %v916, %v916
  %v939 = vpack.c.bf16 %v917, %v917
  %v940 = vpack.c.bf16 %v918, %v918
  %v941 = vpack.c.bf16 %v919, %v919
  %v942 = vpack.c.bf16 %v920, %v920
  %v943 = vpack.c.bf16 %v921, %v921
  %v944 = vpack.c.bf16 %v922, %v922
  %v945 = vpack.c.bf16 %v923, %v923
  %v946 = vpack.c.bf16 %v924, %v924
  %v947 = vpack.c.bf16 %v925, %v925
  %v948 = vpack.c.bf16 %v926, %v926
  %949 = vst [vmem:[#allocation2 + $0x4] sm:$0xf] %v927
  %950 = vst [vmem:[#allocation2 + $0x8] sm:$0xf] %v928
  %951 = vst [vmem:[#allocation2 + $0xc] sm:$0xf] %v929
  %952 = vst [vmem:[#allocation2 + $0x10] sm:$0xf] %v930
  %953 = vst [vmem:[#allocation2 + $0x14] sm:$0xf] %v931
  %954 = vst [vmem:[#allocation2 + $0x18] sm:$0xf] %v932
  %955 = vst [vmem:[#allocation2 + $0x1c] sm:$0xf] %v933
  %956 = vst [vmem:[#allocation2 + $0x20] sm:$0xf] %v934
  %957 = vst [vmem:[#allocation2 + $0x24] sm:$0xf] %v935
  %958 = vst [vmem:[#allocation2 + $0x28] sm:$0xf] %v936
  %959 = vst [vmem:[#allocation2 + $0x2c] sm:$0xf] %v937
  %960 = vst [vmem:[#allocation2 + $0x30] sm:$0xf] %v938
  %961 = vst [vmem:[#allocation2 + $0x34] sm:$0xf] %v939
  %962 = vst [vmem:[#allocation2 + $0x38] sm:$0xf] %v940
  %963 = vst [vmem:[#allocation2 + $0x3c] sm:$0xf] %v941
  %964 = vst [vmem:[#allocation2 + $0x40] sm:$0xf] %v942
  %965 = vst [vmem:[#allocation2 + $0x44] sm:$0xf] %v943
  %966 = vst [vmem:[#allocation2 + $0x48] sm:$0xf] %v944
  %967 = vst [vmem:[#allocation2 + $0x4c] sm:$0xf] %v945
  %968 = vst [vmem:[#allocation2 + $0x50] sm:$0xf] %v946
  %969 = vst [vmem:[#allocation2 + $0x54] sm:$0xf] %v947
  %970 = vst [vmem:[#allocation2 + $0x58] sm:$0xf] %v948
  %v971 = vld [vmem:[#allocation2] sm:$0x8]
  %v972 = vld [vmem:[#allocation2 + $0x4] sm:$0xf]
  %v973 = vld [vmem:[#allocation2 + $0x8] sm:$0xf]
  %v974 = vld [vmem:[#allocation2 + $0xc] sm:$0xf]
  %v975 = vld [vmem:[#allocation2 + $0x10] sm:$0xf]
  %v976 = vld [vmem:[#allocation2 + $0x14] sm:$0xf]
  %v977 = vld [vmem:[#allocation2 + $0x18] sm:$0xf]
  %v978 = vld [vmem:[#allocation2 + $0x1c] sm:$0xf]
  %v979 = vld [vmem:[#allocation2 + $0x20] sm:$0xf]
  %v980 = vld [vmem:[#allocation2 + $0x24] sm:$0xf]
  %v981 = vld [vmem:[#allocation2 + $0x28] sm:$0xf]
  %v982 = vld [vmem:[#allocation2 + $0x2c] sm:$0xf]
  %v983 = vld [vmem:[#allocation2 + $0x30] sm:$0xf]
  %v984 = vld [vmem:[#allocation2 + $0x34] sm:$0xf]
  %v985 = vld [vmem:[#allocation2 + $0x38] sm:$0xf]
  %v986 = vld [vmem:[#allocation2 + $0x3c] sm:$0xf]
  %v987 = vld [vmem:[#allocation2 + $0x40] sm:$0xf]
  %v988 = vld [vmem:[#allocation2 + $0x44] sm:$0xf]
  %v989 = vld [vmem:[#allocation2 + $0x48] sm:$0xf]
  %v990 = vld [vmem:[#allocation2 + $0x4c] sm:$0xf]
  %v991 = vld [vmem:[#allocation2 + $0x50] sm:$0xf]
  %v992 = vld [vmem:[#allocation2 + $0x54] sm:$0xf]
  %v993 = vld [vmem:[#allocation2 + $0x58] sm:$0x7]
  %v994 = vld [vmem:[%s5] sm:$0xf]
  %v995 = vld [vmem:[%s5 + $0x4] sm:$0xf]
  %v996 = vld [vmem:[%s5 + $0x8] sm:$0xf]
  %v997 = vld [vmem:[%s5 + $0xc] sm:$0xf]
  %v998 = vld [vmem:[%s5 + $0x10] sm:$0xf]
  %v999 = vld [vmem:[%s5 + $0x14] sm:$0xf]
  %v1000 = vld [vmem:[%s5 + $0x18] sm:$0xf]
  %v1001 = vld [vmem:[%s5 + $0x1c] sm:$0xf]
  %v1002 = vld [vmem:[%s5 + $0x20] sm:$0xf]
  %v1003 = vld [vmem:[%s5 + $0x24] sm:$0xf]
  %v1004 = vld [vmem:[%s5 + $0x28] sm:$0xf]
  %v1005 = vld [vmem:[%s5 + $0x2c] sm:$0xf]
  %v1006 = vld [vmem:[%s5 + $0x30] sm:$0xf]
  %v1007 = vld [vmem:[%s5 + $0x34] sm:$0xf]
  %v1008 = vld [vmem:[%s5 + $0x38] sm:$0xf]
  %v1009 = vld [vmem:[%s5 + $0x3c] sm:$0xf]
  %v1010 = vld [vmem:[#allocation2 + $0x58] sm:$0xf]
  %s1011 = scalar_lea.vmem %s5, 64
  %v1012 = vld [vmem:[%s1011] sm:$0xf]
  %v1013 = vld [vmem:[%s1011 + $0x4] sm:$0xf]
  %v1014 = vld [vmem:[%s1011 + $0x8] sm:$0xf]
  %v1015 = vld [vmem:[%s1011 + $0xc] sm:$0xf]
  %v1016 = vld [vmem:[%s1011 + $0x10] sm:$0xf]
  %v1017 = vld [vmem:[%s1011 + $0x14] sm:$0xf]
  %v1018 = vld [vmem:[%s1011 + $0x18] sm:$0xf]
  %v1019 = vld [vmem:[%s1011 + $0x1c] sm:$0xf]
  %v1020 = vld [vmem:[%s1011 + $0x20] sm:$0xf]
  %v1021 = vld [vmem:[%s1011 + $0x24] sm:$0xf]
  %v1022 = vld [vmem:[%s1011 + $0x28] sm:$0xf]
  %v1023 = vld [vmem:[%s1011 + $0x2c] sm:$0xf]
  %v1024 = vld [vmem:[%s1011 + $0x30] sm:$0xf]
  %v1025 = vld [vmem:[%s1011 + $0x34] sm:$0xf]
  %v1026 = vld [vmem:[%s1011 + $0x38] sm:$0xf]
  %v1027 = vld [vmem:[%s1011 + $0x3c] sm:$0xf]
  %v1051 = vunpack.c.l.b16 %v971
  %v1052 = vunpack.c.l.b16 %v972
  %v1053 = vunpack.c.l.b16 %v973
  %v1054 = vunpack.c.l.b16 %v974
  %v1055 = vunpack.c.l.b16 %v975
  %v1056 = vunpack.c.l.b16 %v976
  %v1057 = vunpack.c.l.b16 %v977
  %v1058 = vunpack.c.l.b16 %v978
  %v1059 = vunpack.c.l.b16 %v979
  %v1060 = vunpack.c.l.b16 %v980
  %v1061 = vunpack.c.l.b16 %v981
  %v1062 = vunpack.c.l.b16 %v982
  %v1063 = vunpack.c.l.b16 %v983
  %v1064 = vunpack.c.l.b16 %v984
  %v1065 = vunpack.c.l.b16 %v985
  %v1066 = vunpack.c.l.b16 %v986
  %v1067 = vunpack.c.l.b16 %v987
  %v1068 = vunpack.c.l.b16 %v988
  %v1069 = vunpack.c.l.b16 %v989
  %v1070 = vunpack.c.l.b16 %v990
  %v1071 = vunpack.c.l.b16 %v991
  %v1072 = vunpack.c.l.b16 %v992
  %v1073 = vunpack.c.l.b16 %v1010
  %v1074 = vpack.c.b16 %v1052, %v1051
  %v1075 = vpack.c.b16 %v1054, %v1053
  %v1076 = vpack.c.b16 %v1056, %v1055
  %v1077 = vpack.c.b16 %v1058, %v1057
  %v1078 = vpack.c.b16 %v1060, %v1059
  %v1079 = vpack.c.b16 %v1062, %v1061
  %v1080 = vpack.c.b16 %v1064, %v1063
  %v1081 = vpack.c.b16 %v1066, %v1065
  %v1082 = vpack.c.b16 %v1068, %v1067
  %v1083 = vpack.c.b16 %v1070, %v1069
  %v1084 = vpack.c.b16 %v1072, %v1071
  %v1085 = vpack.c.b16 %v1073, %v1073
  %v1087 = vshrl.u32 %v1074, 16
  %v1089 = vrot.slane %v1087, 3
  %v1090 = vshll.u32 %v1074, 16
  %v1092 = vrot.slane %v1090, 4
  %v1093 = vor.u32 %v1089, %v1092
  %v1095 = vshrl.u32 %v1075, 16
  %v1097 = vrot.slane %v1095, 3
  %v1098 = vshll.u32 %v1075, 16
  %v1100 = vrot.slane %v1098, 4
  %v1101 = vor.u32 %v1097, %v1100
  %v1102 = vsel %vm171, %v1093, %v1101
  %v1104 = vshrl.u32 %v1076, 16
  %v1106 = vrot.slane %v1104, 3
  %v1107 = vshll.u32 %v1076, 16
  %v1109 = vrot.slane %v1107, 4
  %v1110 = vor.u32 %v1106, %v1109
  %v1111 = vsel %vm171, %v1101, %v1110
  %v1113 = vshrl.u32 %v1077, 16
  %v1115 = vrot.slane %v1113, 3
  %v1116 = vshll.u32 %v1077, 16
  %v1118 = vrot.slane %v1116, 4
  %v1119 = vor.u32 %v1115, %v1118
  %v1120 = vsel %vm171, %v1110, %v1119
  %v1122 = vshrl.u32 %v1078, 16
  %v1124 = vrot.slane %v1122, 3
  %v1125 = vshll.u32 %v1078, 16
  %v1127 = vrot.slane %v1125, 4
  %v1128 = vor.u32 %v1124, %v1127
  %v1129 = vsel %vm171, %v1119, %v1128
  %v1131 = vshrl.u32 %v1079, 16
  %v1133 = vrot.slane %v1131, 3
  %v1134 = vshll.u32 %v1079, 16
  %v1136 = vrot.slane %v1134, 4
  %v1137 = vor.u32 %v1133, %v1136
  %v1138 = vsel %vm171, %v1128, %v1137
  %v1140 = vshrl.u32 %v1080, 16
  %v1142 = vrot.slane %v1140, 3
  %v1143 = vshll.u32 %v1080, 16
  %v1145 = vrot.slane %v1143, 4
  %v1146 = vor.u32 %v1142, %v1145
  %v1147 = vsel %vm171, %v1137, %v1146
  %v1149 = vshrl.u32 %v1081, 16
  %v1151 = vrot.slane %v1149, 3
  %v1152 = vshll.u32 %v1081, 16
  %v1154 = vrot.slane %v1152, 4
  %v1155 = vor.u32 %v1151, %v1154
  %v1156 = vsel %vm171, %v1146, %v1155
  %v1158 = vshrl.u32 %v1082, 16
  %v1160 = vrot.slane %v1158, 3
  %v1161 = vshll.u32 %v1082, 16
  %v1163 = vrot.slane %v1161, 4
  %v1164 = vor.u32 %v1160, %v1163
  %v1165 = vsel %vm171, %v1155, %v1164
  %v1167 = vshrl.u32 %v1083, 16
  %v1169 = vrot.slane %v1167, 3
  %v1170 = vshll.u32 %v1083, 16
  %v1172 = vrot.slane %v1170, 4
  %v1173 = vor.u32 %v1169, %v1172
  %v1174 = vsel %vm171, %v1164, %v1173
  %v1176 = vshrl.u32 %v1084, 16
  %v1178 = vrot.slane %v1176, 3
  %v1179 = vshll.u32 %v1084, 16
  %v1181 = vrot.slane %v1179, 4
  %v1182 = vor.u32 %v1178, %v1181
  %v1183 = vsel %vm171, %v1173, %v1182
  %v1185 = vshrl.u32 %v1085, 16
  %v1187 = vrot.slane %v1185, 3
  %v1188 = vshll.u32 %v1085, 16
  %v1190 = vrot.slane %v1188, 4
  %v1191 = vor.u32 %v1187, %v1190
  %v1192 = vsel %vm171, %v1182, %v1191
  %v1220 = vunpack.c.l.b16 %v1012
  %v1221 = vunpack.c.l.b16 %v1013
  %v1222 = vunpack.c.l.b16 %v1014
  %v1223 = vunpack.c.l.b16 %v1015
  %v1224 = vunpack.c.l.b16 %v1016
  %v1225 = vunpack.c.l.b16 %v1017
  %v1226 = vunpack.c.l.b16 %v1018
  %v1227 = vunpack.c.l.b16 %v1019
  %v1228 = vunpack.c.l.b16 %v1020
  %v1229 = vunpack.c.l.b16 %v1021
  %v1230 = vunpack.c.l.b16 %v1022
  %v1231 = vunpack.c.l.b16 %v1023
  %v1232 = vunpack.c.l.b16 %v1024
  %v1233 = vunpack.c.l.b16 %v1025
  %v1234 = vunpack.c.l.b16 %v1026
  %v1235 = vunpack.c.l.b16 %v1027
  %v1236 = vpack.c.b16 %v1221, %v1220
  %v1237 = vpack.c.b16 %v1223, %v1222
  %v1238 = vpack.c.b16 %v1225, %v1224
  %v1239 = vpack.c.b16 %v1227, %v1226
  %v1240 = vpack.c.b16 %v1229, %v1228
  %v1241 = vpack.c.b16 %v1231, %v1230
  %v1242 = vpack.c.b16 %v1233, %v1232
  %v1243 = vpack.c.b16 %v1235, %v1234
  %1252 = vmatpush.bf16.msra.mxu0 %v1243
  %1253 = vmatpush.bf16.msra.mxu0 %v1242
  %1254 = vmatpush.bf16.msra.mxu0 %v1241
  %1255 = vmatpush.bf16.msra.mxu0 %v1240
  %1256 = vmatpush.bf16.msra.mxu0 %v1239
  %1257 = vmatpush.bf16.msra.mxu0 %v1238
  %1258 = vmatpush.bf16.msra.mxu0 %v1237
  %1259 = vmatpush.bf16.msra.mxu0 %v1236
  %1260 = vmatmul.bf16.gmra.mxu0 %v1102
  %v1261 = vpop.f32.mrf.mxu0
  %v1262 = vadd.f32 0.0, %v1261
  %v1263 = vpop.f32.mrf.mxu0
  %v1264 = vadd.f32 0.0, %v1263
  %1265 = vmatmul.bf16.gmra.mxu0 %v1111
  %v1266 = vpop.f32.mrf.mxu0
  %v1267 = vadd.f32 0.0, %v1266
  %v1268 = vpop.f32.mrf.mxu0
  %v1269 = vadd.f32 0.0, %v1268
  %1270 = vmatmul.bf16.gmra.mxu0 %v1120
  %v1271 = vpop.f32.mrf.mxu0
  %v1272 = vadd.f32 0.0, %v1271
  %v1273 = vpop.f32.mrf.mxu0
  %v1274 = vadd.f32 0.0, %v1273
  %1275 = vmatmul.bf16.gmra.mxu0 %v1129
  %v1276 = vpop.f32.mrf.mxu0
  %v1277 = vadd.f32 0.0, %v1276
  %v1278 = vpop.f32.mrf.mxu0
  %v1279 = vadd.f32 0.0, %v1278
  %1280 = vmatmul.bf16.gmra.mxu0 %v1138
  %v1281 = vpop.f32.mrf.mxu0
  %v1282 = vadd.f32 0.0, %v1281
  %v1283 = vpop.f32.mrf.mxu0
  %v1284 = vadd.f32 0.0, %v1283
  %1285 = vmatmul.bf16.gmra.mxu0 %v1147
  %v1286 = vpop.f32.mrf.mxu0
  %v1287 = vadd.f32 0.0, %v1286
  %v1288 = vpop.f32.mrf.mxu0
  %v1289 = vadd.f32 0.0, %v1288
  %1290 = vmatmul.bf16.gmra.mxu0 %v1156
  %v1291 = vpop.f32.mrf.mxu0
  %v1292 = vadd.f32 0.0, %v1291
  %v1293 = vpop.f32.mrf.mxu0
  %v1294 = vadd.f32 0.0, %v1293
  %1295 = vmatmul.bf16.gmra.mxu0 %v1165
  %v1296 = vpop.f32.mrf.mxu0
  %v1297 = vadd.f32 0.0, %v1296
  %v1298 = vpop.f32.mrf.mxu0
  %v1299 = vadd.f32 0.0, %v1298
  %1300 = vmatmul.bf16.gmra.mxu0 %v1174
  %v1301 = vpop.f32.mrf.mxu0
  %v1302 = vadd.f32 0.0, %v1301
  %v1303 = vpop.f32.mrf.mxu0
  %v1304 = vadd.f32 0.0, %v1303
  %1305 = vmatmul.bf16.gmra.mxu0 %v1183
  %v1306 = vpop.f32.mrf.mxu0
  %v1307 = vadd.f32 0.0, %v1306
  %v1308 = vpop.f32.mrf.mxu0
  %v1309 = vadd.f32 0.0, %v1308
  %1310 = vmatmul.bf16.gmra.mxu0 %v1192
  %v1311 = vpop.f32.mrf.mxu0
  %v1312 = vadd.f32 0.0, %v1311
  %v1313 = vpop.f32.mrf.mxu0
  %v1314 = vadd.f32 0.0, %v1313
  %1315 = vdwg.mxu0
  %v1317 = vunpack.c.l.b16 %v993
  %v1318 = vpack.c.b16 %v1317, %v1317
  %v1319 = vrot.slane %v1074, 3
  %v1320 = vrot.slane %v1075, 3
  %v1321 = vsel %vm405, %v1319, %v1320
  %v1322 = vrot.slane %v1076, 3
  %v1323 = vsel %vm405, %v1320, %v1322
  %v1324 = vrot.slane %v1077, 3
  %v1325 = vsel %vm405, %v1322, %v1324
  %v1326 = vrot.slane %v1078, 3
  %v1327 = vsel %vm405, %v1324, %v1326
  %v1328 = vrot.slane %v1079, 3
  %v1329 = vsel %vm405, %v1326, %v1328
  %v1330 = vrot.slane %v1080, 3
  %v1331 = vsel %vm405, %v1328, %v1330
  %v1332 = vrot.slane %v1081, 3
  %v1333 = vsel %vm405, %v1330, %v1332
  %v1334 = vrot.slane %v1082, 3
  %v1335 = vsel %vm405, %v1332, %v1334
  %v1336 = vrot.slane %v1083, 3
  %v1337 = vsel %vm405, %v1334, %v1336
  %v1338 = vrot.slane %v1084, 3
  %v1339 = vsel %vm405, %v1336, %v1338
  %v1340 = vrot.slane %v1318, 3
  %v1341 = vsel %vm405, %v1338, %v1340
  %v1369 = vunpack.c.l.b16 %v994
  %v1370 = vunpack.c.l.b16 %v995
  %v1371 = vunpack.c.l.b16 %v996
  %v1372 = vunpack.c.l.b16 %v997
  %v1373 = vunpack.c.l.b16 %v998
  %v1374 = vunpack.c.l.b16 %v999
  %v1375 = vunpack.c.l.b16 %v1000
  %v1376 = vunpack.c.l.b16 %v1001
  %v1377 = vunpack.c.l.b16 %v1002
  %v1378 = vunpack.c.l.b16 %v1003
  %v1379 = vunpack.c.l.b16 %v1004
  %v1380 = vunpack.c.l.b16 %v1005
  %v1381 = vunpack.c.l.b16 %v1006
  %v1382 = vunpack.c.l.b16 %v1007
  %v1383 = vunpack.c.l.b16 %v1008
  %v1384 = vunpack.c.l.b16 %v1009
  %v1385 = vpack.c.b16 %v1370, %v1369
  %v1386 = vpack.c.b16 %v1372, %v1371
  %v1387 = vpack.c.b16 %v1374, %v1373
  %v1388 = vpack.c.b16 %v1376, %v1375
  %v1389 = vpack.c.b16 %v1378, %v1377
  %v1390 = vpack.c.b16 %v1380, %v1379
  %v1391 = vpack.c.b16 %v1382, %v1381
  %v1392 = vpack.c.b16 %v1384, %v1383
  %1401 = vmatpush.bf16.msra.mxu0 %v1392
  %1402 = vmatpush.bf16.msra.mxu0 %v1391
  %1403 = vmatpush.bf16.msra.mxu0 %v1390
  %1404 = vmatpush.bf16.msra.mxu0 %v1389
  %1405 = vmatpush.bf16.msra.mxu0 %v1388
  %1406 = vmatpush.bf16.msra.mxu0 %v1387
  %1407 = vmatpush.bf16.msra.mxu0 %v1386
  %1408 = vmatpush.bf16.msra.mxu0 %v1385
  %1409 = vmatmul.bf16.gmra.mxu0 %v1321
  %v1410 = vpop.f32.mrf.mxu0
  %v1411 = vadd.f32 %v1262, %v1410
  %v1412 = vpop.f32.mrf.mxu0
  %v1413 = vadd.f32 %v1264, %v1412
  %1414 = vmatmul.bf16.gmra.mxu0 %v1323
  %v1415 = vpop.f32.mrf.mxu0
  %v1416 = vadd.f32 %v1267, %v1415
  %v1417 = vpop.f32.mrf.mxu0
  %v1418 = vadd.f32 %v1269, %v1417
  %1419 = vmatmul.bf16.gmra.mxu0 %v1325
  %v1420 = vpop.f32.mrf.mxu0
  %v1421 = vadd.f32 %v1272, %v1420
  %v1422 = vpop.f32.mrf.mxu0
  %v1423 = vadd.f32 %v1274, %v1422
  %1424 = vmatmul.bf16.gmra.mxu0 %v1327
  %v1425 = vpop.f32.mrf.mxu0
  %v1426 = vadd.f32 %v1277, %v1425
  %v1427 = vpop.f32.mrf.mxu0
  %v1428 = vadd.f32 %v1279, %v1427
  %1429 = vmatmul.bf16.gmra.mxu0 %v1329
  %v1430 = vpop.f32.mrf.mxu0
  %v1431 = vadd.f32 %v1282, %v1430
  %v1432 = vpop.f32.mrf.mxu0
  %v1433 = vadd.f32 %v1284, %v1432
  %1434 = vmatmul.bf16.gmra.mxu0 %v1331
  %v1435 = vpop.f32.mrf.mxu0
  %v1436 = vadd.f32 %v1287, %v1435
  %v1437 = vpop.f32.mrf.mxu0
  %v1438 = vadd.f32 %v1289, %v1437
  %1439 = vmatmul.bf16.gmra.mxu0 %v1333
  %v1440 = vpop.f32.mrf.mxu0
  %v1441 = vadd.f32 %v1292, %v1440
  %v1442 = vpop.f32.mrf.mxu0
  %v1443 = vadd.f32 %v1294, %v1442
  %1444 = vmatmul.bf16.gmra.mxu0 %v1335
  %v1445 = vpop.f32.mrf.mxu0
  %v1446 = vadd.f32 %v1297, %v1445
  %v1447 = vpop.f32.mrf.mxu0
  %v1448 = vadd.f32 %v1299, %v1447
  %1449 = vmatmul.bf16.gmra.mxu0 %v1337
  %v1450 = vpop.f32.mrf.mxu0
  %v1451 = vadd.f32 %v1302, %v1450
  %v1452 = vpop.f32.mrf.mxu0
  %v1453 = vadd.f32 %v1304, %v1452
  %1454 = vmatmul.bf16.gmra.mxu0 %v1339
  %v1455 = vpop.f32.mrf.mxu0
  %v1456 = vadd.f32 %v1307, %v1455
  %v1457 = vpop.f32.mrf.mxu0
  %v1458 = vadd.f32 %v1309, %v1457
  %1459 = vmatmul.bf16.gmra.mxu0 %v1341
  %v1460 = vpop.f32.mrf.mxu0
  %v1461 = vadd.f32 %v1312, %v1460
  %v1462 = vpop.f32.mrf.mxu0
  %v1463 = vadd.f32 %v1314, %v1462
  %1464 = vdwg.mxu0
  %s1465 = scalar_lea.vmem %s5, 128
  %v1466 = vld [vmem:[%s1465] sm:$0xf]
  %v1467 = vld [vmem:[%s1465 + $0x4] sm:$0xf]
  %v1468 = vld [vmem:[%s1465 + $0x8] sm:$0xf]
  %v1469 = vld [vmem:[%s1465 + $0xc] sm:$0xf]
  %v1470 = vld [vmem:[%s1465 + $0x10] sm:$0xf]
  %v1471 = vld [vmem:[%s1465 + $0x14] sm:$0xf]
  %v1472 = vld [vmem:[%s1465 + $0x18] sm:$0xf]
  %v1473 = vld [vmem:[%s1465 + $0x1c] sm:$0xf]
  %v1474 = vld [vmem:[%s1465 + $0x20] sm:$0xf]
  %v1475 = vld [vmem:[%s1465 + $0x24] sm:$0xf]
  %v1476 = vld [vmem:[%s1465 + $0x28] sm:$0xf]
  %v1477 = vld [vmem:[%s1465 + $0x2c] sm:$0xf]
  %v1478 = vld [vmem:[%s1465 + $0x30] sm:$0xf]
  %v1479 = vld [vmem:[%s1465 + $0x34] sm:$0xf]
  %v1480 = vld [vmem:[%s1465 + $0x38] sm:$0xf]
  %v1481 = vld [vmem:[%s1465 + $0x3c] sm:$0xf]
  %v1482 = vpack.c.b16 %v1053, %v1052
  %v1483 = vpack.c.b16 %v1055, %v1054
  %v1484 = vpack.c.b16 %v1057, %v1056
  %v1485 = vpack.c.b16 %v1059, %v1058
  %v1486 = vpack.c.b16 %v1061, %v1060
  %v1487 = vpack.c.b16 %v1063, %v1062
  %v1488 = vpack.c.b16 %v1065, %v1064
  %v1489 = vpack.c.b16 %v1067, %v1066
  %v1490 = vpack.c.b16 %v1069, %v1068
  %v1491 = vpack.c.b16 %v1071, %v1070
  %v1492 = vpack.c.b16 %v1073, %v1072
  %v1520 = vunpack.c.l.b16 %v1466
  %v1521 = vunpack.c.l.b16 %v1467
  %v1522 = vunpack.c.l.b16 %v1468
  %v1523 = vunpack.c.l.b16 %v1469
  %v1524 = vunpack.c.l.b16 %v1470
  %v1525 = vunpack.c.l.b16 %v1471
  %v1526 = vunpack.c.l.b16 %v1472
  %v1527 = vunpack.c.l.b16 %v1473
  %v1528 = vunpack.c.l.b16 %v1474
  %v1529 = vunpack.c.l.b16 %v1475
  %v1530 = vunpack.c.l.b16 %v1476
  %v1531 = vunpack.c.l.b16 %v1477
  %v1532 = vunpack.c.l.b16 %v1478
  %v1533 = vunpack.c.l.b16 %v1479
  %v1534 = vunpack.c.l.b16 %v1480
  %v1535 = vunpack.c.l.b16 %v1481
  %v1536 = vpack.c.b16 %v1521, %v1520
  %v1537 = vpack.c.b16 %v1523, %v1522
  %v1538 = vpack.c.b16 %v1525, %v1524
  %v1539 = vpack.c.b16 %v1527, %v1526
  %v1540 = vpack.c.b16 %v1529, %v1528
  %v1541 = vpack.c.b16 %v1531, %v1530
  %v1542 = vpack.c.b16 %v1533, %v1532
  %v1543 = vpack.c.b16 %v1535, %v1534
  %1552 = vmatpush.bf16.msra.mxu0 %v1543
  %1553 = vmatpush.bf16.msra.mxu0 %v1542
  %1554 = vmatpush.bf16.msra.mxu0 %v1541
  %1555 = vmatpush.bf16.msra.mxu0 %v1540
  %1556 = vmatpush.bf16.msra.mxu0 %v1539
  %1557 = vmatpush.bf16.msra.mxu0 %v1538
  %1558 = vmatpush.bf16.msra.mxu0 %v1537
  %1559 = vmatpush.bf16.msra.mxu0 %v1536
  %1560 = vmatmul.bf16.gmra.mxu0 %v1482
  %v1561 = vpop.f32.mrf.mxu0
  %v1562 = vadd.f32 0.0, %v1561
  %v1563 = vpop.f32.mrf.mxu0
  %v1564 = vadd.f32 0.0, %v1563
  %1565 = vmatmul.bf16.gmra.mxu0 %v1483
  %v1566 = vpop.f32.mrf.mxu0
  %v1567 = vadd.f32 0.0, %v1566
  %v1568 = vpop.f32.mrf.mxu0
  %v1569 = vadd.f32 0.0, %v1568
  %1570 = vmatmul.bf16.gmra.mxu0 %v1484
  %v1571 = vpop.f32.mrf.mxu0
  %v1572 = vadd.f32 0.0, %v1571
  %v1573 = vpop.f32.mrf.mxu0
  %v1574 = vadd.f32 0.0, %v1573
  %1575 = vmatmul.bf16.gmra.mxu0 %v1485
  %v1576 = vpop.f32.mrf.mxu0
  %v1577 = vadd.f32 0.0, %v1576
  %v1578 = vpop.f32.mrf.mxu0
  %v1579 = vadd.f32 0.0, %v1578
  %1580 = vmatmul.bf16.gmra.mxu0 %v1486
  %v1581 = vpop.f32.mrf.mxu0
  %v1582 = vadd.f32 0.0, %v1581
  %v1583 = vpop.f32.mrf.mxu0
  %v1584 = vadd.f32 0.0, %v1583
  %1585 = vmatmul.bf16.gmra.mxu0 %v1487
  %v1586 = vpop.f32.mrf.mxu0
  %v1587 = vadd.f32 0.0, %v1586
  %v1588 = vpop.f32.mrf.mxu0
  %v1589 = vadd.f32 0.0, %v1588
  %1590 = vmatmul.bf16.gmra.mxu0 %v1488
  %v1591 = vpop.f32.mrf.mxu0
  %v1592 = vadd.f32 0.0, %v1591
  %v1593 = vpop.f32.mrf.mxu0
  %v1594 = vadd.f32 0.0, %v1593
  %1595 = vmatmul.bf16.gmra.mxu0 %v1489
  %v1596 = vpop.f32.mrf.mxu0
  %v1597 = vadd.f32 0.0, %v1596
  %v1598 = vpop.f32.mrf.mxu0
  %v1599 = vadd.f32 0.0, %v1598
  %1600 = vmatmul.bf16.gmra.mxu0 %v1490
  %v1601 = vpop.f32.mrf.mxu0
  %v1602 = vadd.f32 0.0, %v1601
  %v1603 = vpop.f32.mrf.mxu0
  %v1604 = vadd.f32 0.0, %v1603
  %1605 = vmatmul.bf16.gmra.mxu0 %v1491
  %v1606 = vpop.f32.mrf.mxu0
  %v1607 = vadd.f32 0.0, %v1606
  %v1608 = vpop.f32.mrf.mxu0
  %v1609 = vadd.f32 0.0, %v1608
  %1610 = vmatmul.bf16.gmra.mxu0 %v1492
  %v1611 = vpop.f32.mrf.mxu0
  %v1612 = vadd.f32 0.0, %v1611
  %v1613 = vpop.f32.mrf.mxu0
  %v1614 = vadd.f32 0.0, %v1613
  %1615 = vdwg.mxu0
  %v1616 = vadd.f32 %v1411, %v1562
  %v1617 = vadd.f32 %v1413, %v1564
  %v1618 = vadd.f32 %v1416, %v1567
  %v1619 = vadd.f32 %v1418, %v1569
  %v1620 = vadd.f32 %v1421, %v1572
  %v1621 = vadd.f32 %v1423, %v1574
  %v1622 = vadd.f32 %v1426, %v1577
  %v1623 = vadd.f32 %v1428, %v1579
  %v1624 = vadd.f32 %v1431, %v1582
  %v1625 = vadd.f32 %v1433, %v1584
  %v1626 = vadd.f32 %v1436, %v1587
  %v1627 = vadd.f32 %v1438, %v1589
  %v1628 = vadd.f32 %v1441, %v1592
  %v1629 = vadd.f32 %v1443, %v1594
  %v1630 = vadd.f32 %v1446, %v1597
  %v1631 = vadd.f32 %v1448, %v1599
  %v1632 = vadd.f32 %v1451, %v1602
  %v1633 = vadd.f32 %v1453, %v1604
  %v1634 = vadd.f32 %v1456, %v1607
  %v1635 = vadd.f32 %v1458, %v1609
  %v1636 = vadd.f32 %v1461, %v1612
  %v1637 = vadd.f32 %v1463, %v1614
  %v1638 = vld [vmem:[%s6] sm:$0x1]
  %v1640 = vperm.slane %v1638, 0
  %v1642 = vadd.f32 %v1616, %v1640
  %v1643 = vadd.f32 %v1617, %v1640
  %v1644 = vadd.f32 %v1618, %v1640
  %v1645 = vadd.f32 %v1619, %v1640
  %v1646 = vadd.f32 %v1620, %v1640
  %v1647 = vadd.f32 %v1621, %v1640
  %v1648 = vadd.f32 %v1622, %v1640
  %v1649 = vadd.f32 %v1623, %v1640
  %v1650 = vadd.f32 %v1624, %v1640
  %v1651 = vadd.f32 %v1625, %v1640
  %v1652 = vadd.f32 %v1626, %v1640
  %v1653 = vadd.f32 %v1627, %v1640
  %v1654 = vadd.f32 %v1628, %v1640
  %v1655 = vadd.f32 %v1629, %v1640
  %v1656 = vadd.f32 %v1630, %v1640
  %v1657 = vadd.f32 %v1631, %v1640
  %v1658 = vadd.f32 %v1632, %v1640
  %v1659 = vadd.f32 %v1633, %v1640
  %v1660 = vadd.f32 %v1634, %v1640
  %v1661 = vadd.f32 %v1635, %v1640
  %v1662 = vadd.f32 %v1636, %v1640
  %v1663 = vadd.f32 %v1637, %v1640
  %v1664 = vmax.f32 %v1642, 0.0
  %v1665 = vmax.f32 %v1643, 0.0
  %v1666 = vmax.f32 %v1644, 0.0
  %v1667 = vmax.f32 %v1645, 0.0
  %v1668 = vmax.f32 %v1646, 0.0
  %v1669 = vmax.f32 %v1647, 0.0
  %v1670 = vmax.f32 %v1648, 0.0
  %v1671 = vmax.f32 %v1649, 0.0
  %v1672 = vmax.f32 %v1650, 0.0
  %v1673 = vmax.f32 %v1651, 0.0
  %v1674 = vmax.f32 %v1652, 0.0
  %v1675 = vmax.f32 %v1653, 0.0
  %v1676 = vmax.f32 %v1654, 0.0
  %v1677 = vmax.f32 %v1655, 0.0
  %v1678 = vmax.f32 %v1656, 0.0
  %v1679 = vmax.f32 %v1657, 0.0
  %v1680 = vmax.f32 %v1658, 0.0
  %v1681 = vmax.f32 %v1659, 0.0
  %v1682 = vmax.f32 %v1660, 0.0
  %v1683 = vmax.f32 %v1661, 0.0
  %v1684 = vmax.f32 %v1662, 0.0
  %v1685 = vmax.f32 %v1663, 0.0
  %v1686 = vld [vmem:[%s2] sm:$0xff]
  %v1687 = vld [vmem:[%s2 + $0x8] sm:$0xff]
  %vm1688 = vcmask 392192
  %v1690 = vsel %vm1688, %v1687, 0
  %1692 = vmatpush.msra.mxu0 %v1679
  %1693 = vmatpush.msra.mxu0 %v1678
  %1694 = vmatpush.msra.mxu0 %v1677
  %1695 = vmatpush.msra.mxu0 %v1676
  %1696 = vmatpush.msra.mxu0 %v1675
  %1697 = vmatpush.msra.mxu0 %v1674
  %1698 = vmatpush.msra.mxu0 %v1673
  %1699 = vmatpush.msra.mxu0 %v1672
  %1700 = vmatpush.msra.mxu0 %v1671
  %1701 = vmatpush.msra.mxu0 %v1670
  %1702 = vmatpush.msra.mxu0 %v1669
  %1703 = vmatpush.msra.mxu0 %v1668
  %1704 = vmatpush.msra.mxu0 %v1667
  %1705 = vmatpush.msra.mxu0 %v1666
  %1706 = vmatpush.msra.mxu0 %v1665
  %1707 = vmatpush.msra.mxu0 %v1664
  %1708 = vmatmul.f32.gmra.mxu0 %v1686
  %v1709 = vpop.f32.mrf.mxu0
  %v1710 = vadd.f32 0.0, %v1709
  %1711 = vdwg.mxu0
  %1712 = vmatpush.msra.mxu0 0.0
  %1713 = vmatpush.msra.mxu0 0.0
  %1714 = vmatpush.msra.mxu0 0.0
  %1715 = vmatpush.msra.mxu0 0.0
  %1716 = vmatpush.msra.mxu0 0.0
  %1717 = vmatpush.msra.mxu0 0.0
  %1718 = vmatpush.msra.mxu0 0.0
  %1719 = vmatpush.msra.mxu0 0.0
  %1720 = vmatpush.msra.mxu0 0.0
  %1721 = vmatpush.msra.mxu0 0.0
  %1722 = vmatpush.msra.mxu0 %v1685
  %1723 = vmatpush.msra.mxu0 %v1684
  %1724 = vmatpush.msra.mxu0 %v1683
  %1725 = vmatpush.msra.mxu0 %v1682
  %1726 = vmatpush.msra.mxu0 %v1681
  %1727 = vmatpush.msra.mxu0 %v1680
  %1728 = vmatmul.f32.gmra.mxu0 %v1690
  %v1729 = vpop.f32.mrf.mxu0
  %v1730 = vadd.f32 %v1710, %v1729
  %1731 = vdwg.mxu0
  %v1732 = vpack.c.bf16 %v1730, %v1730
  %v1733 = vld [vmem:[%s7] sm:$0xf]
  %v1734 = vld [vmem:[%s7 + $0x4] sm:$0xf]
  %v1735 = vld [vmem:[%s7 + $0x8] sm:$0xf]
  %v1736 = vld [vmem:[%s7 + $0xc] sm:$0xf]
  %v1737 = vld [vmem:[%s7 + $0x10] sm:$0xf]
  %v1738 = vld [vmem:[%s7 + $0x14] sm:$0xf]
  %v1739 = vld [vmem:[%s7 + $0x18] sm:$0xf]
  %v1740 = vld [vmem:[%s7 + $0x1c] sm:$0xf]
  %v1741 = vld [vmem:[%s7 + $0x20] sm:$0xf]
  %v1742 = vld [vmem:[%s7 + $0x24] sm:$0xf]
  %v1743 = vld [vmem:[%s7 + $0x28] sm:$0xf]
  %v1744 = vld [vmem:[%s7 + $0x2c] sm:$0xf]
  %v1745 = vld [vmem:[%s7 + $0x30] sm:$0xf]
  %v1746 = vld [vmem:[%s7 + $0x34] sm:$0xf]
  %v1747 = vld [vmem:[%s7 + $0x38] sm:$0xf]
  %v1748 = vld [vmem:[%s7 + $0x3c] sm:$0xf]
  %v1749 = vld [vmem:[%s8] sm:$0x1]
  %v1751 = vperm.slane %v1749, 0
  %v1769 = vunpack.c.l.b16 %v1733
  %v1770 = vunpack.c.l.b16 %v1734
  %v1771 = vunpack.c.l.b16 %v1735
  %v1772 = vunpack.c.l.b16 %v1736
  %v1773 = vunpack.c.l.b16 %v1737
  %v1774 = vunpack.c.l.b16 %v1738
  %v1775 = vunpack.c.l.b16 %v1739
  %v1776 = vunpack.c.l.b16 %v1740
  %v1777 = vunpack.c.l.b16 %v1741
  %v1778 = vunpack.c.l.b16 %v1742
  %v1779 = vunpack.c.l.b16 %v1743
  %v1780 = vunpack.c.l.b16 %v1744
  %v1781 = vunpack.c.l.b16 %v1745
  %v1782 = vunpack.c.l.b16 %v1746
  %v1783 = vunpack.c.l.b16 %v1747
  %v1784 = vunpack.c.l.b16 %v1748
  %v1785 = vpack.c.b16 %v1770, %v1769
  %v1786 = vpack.c.b16 %v1772, %v1771
  %v1787 = vpack.c.b16 %v1774, %v1773
  %v1788 = vpack.c.b16 %v1776, %v1775
  %v1789 = vpack.c.b16 %v1778, %v1777
  %v1790 = vpack.c.b16 %v1780, %v1779
  %v1791 = vpack.c.b16 %v1782, %v1781
  %v1792 = vpack.c.b16 %v1784, %v1783
  %1801 = vmatpush.bf16.msra.mxu0 %v1792
  %1802 = vmatpush.bf16.msra.mxu0 %v1791
  %1803 = vmatpush.bf16.msra.mxu0 %v1790
  %1804 = vmatpush.bf16.msra.mxu0 %v1789
  %1805 = vmatpush.bf16.msra.mxu0 %v1788
  %1806 = vmatpush.bf16.msra.mxu0 %v1787
  %1807 = vmatpush.bf16.msra.mxu0 %v1786
  %1808 = vmatpush.bf16.msra.mxu0 %v1785
  %1809 = vmatmul.bf16.gmra.mxu0 %v1732
  %v1810 = vpop.f32.mrf.mxu0
  %v1811 = vadd.f32 %v1751, %v1810
  %v1812 = vpop.f32.mrf.mxu0
  %1813 = vdwg.mxu0
  %1814 = vst [vmem:[%s9] sm:$0xff] %v1811
  // Predicated region
  $region38: #{tcn_encoder_forward.1} parent=0 // pred_check
    _
  $region39: #{tcn_encoder_forward.1} parent=0 // pred_check_branch
    %1816 = sbr.rel (0) target = $region41
  $region40: #{tcn_encoder_forward.1} parent=0 // pred_region
    _
  $region41: #{tcn_encoder_forward.1} parent=0 // pred_fallthru
    _
  // Predicated region
  $region42: #{tcn_encoder_forward.1} parent=0 // pred_check
    _
  $region43: #{tcn_encoder_forward.1} parent=0 // pred_check_branch
    %1818 = sbr.rel (0) target = $region45
  $region44: #{tcn_encoder_forward.1} parent=0 // pred_region
    _
  $region45: #{tcn_encoder_forward.1} parent=0 // pred_fallthru
    _

</llo_original>
